<compile_context>
chip_gen: v7x
topology: tpu7x:2x2x1
jax: 0.10.0
libtpu: 0.0.40
codegen_flags: <defaults>
</compile_context>

<pallas_src>
import functools

import jax
import jax.numpy as jnp
from jax.experimental import pallas as pl
from jax.experimental.pallas import tpu as pltpu


def _ffc_resblock_kernel(x_ref, mask_ref, w1_ref, b1_ref, w2_ref, w3_ref, b3_ref,
                         o_ref, pad_ref, colA_ref, colB_ref,
                         *, b_tile, Limg, simg, Wp, slack, L, res_scale,
                         compute_dtype):
    C = w3_ref.shape[0]
    cdt = compute_dtype
    f32 = jnp.float32

    # ---- zero the halo slack (guards against stale NaN/Inf in reused scratch). ----
    zslack = jnp.zeros((C, slack), f32)
    pad_ref[:, :slack] = zslack
    pad_ref[:, slack + L:slack + L + slack] = zslack

    # ---- pack the b_tile padded images into the lane-contiguous interior. ----
    # Per-image stride simg is a multiple of 128, so every image starts lane-aligned.
    gap = simg - Limg
    zgap = jnp.zeros((C, gap), f32) if gap else None
    for b in range(b_tile):
        off = slack + b * simg
        pad_ref[:, off:off + Limg] = x_ref[b]
        if gap:
            pad_ref[:, off + Limg:off + simg] = zgap

    x_pk = pad_ref[:, slack:slack + L]           # packed fp32 input (for residuals)
    mask = mask_ref[...]                         # (1, L) 1=real interior pixel

    # Tap order: dy-major, dx-minor; matches the (C, 9C) weight packing in the wrapper.
    shifts = tuple(dy * Wp + dx for dy in (-1, 0, 1) for dx in (-1, 0, 1))
    col_refs = (colA_ref, colB_ref)

    def conv3x3(w_ref):
        # dy-chunked im2col: 3 chunks of (3C, L) with K = 3C matmuls, fp32 accumulate.
        # Alternating col buffers let chunk g+1's tap copies overlap chunk g's matmul.
        acc = None
        for g in range(3):
            col = col_refs[g & 1]
            for j in range(3):
                s = shifts[3 * g + j]
                col[j * C:(j + 1) * C, :] = (
                    pad_ref[:, slack + s:slack + s + L].astype(cdt))
            part = jnp.dot(w_ref[:, g * 3 * C:(g + 1) * 3 * C], col[...],
                           preferred_element_type=f32)
            acc = part if acc is None else acc + part
        return acc

    # conv1 -> bias -> ReLU
    h = jnp.maximum(conv3x3(w1_ref) + b1_ref[...], 0.0)

    # conv2 input: re-zero padded-border / gap lanes (exact conv zero-padding).
    pad_ref[:, slack:slack + L] = h * mask
    t = conv3x3(w2_ref) + x_pk                   # == s - b2 (b2 folded into b3')

    # SFB 1x1 fuse of concat([s, s]):  (w3a + w3b) @ s + b3  ==  w3sum @ t + b3'
    sfb = jnp.dot(w3_ref[...], t.astype(cdt), preferred_element_type=f32) + b3_ref[...]
    if res_scale != 1.0:                         # skipped at trace time when == 1
        sfb = sfb * res_scale
    out = sfb + x_pk                             # border lanes hold garbage; host slices

    for b in range(b_tile):
        o_ref[b] = out[:, b * simg:b * simg + Limg].astype(o_ref.dtype)


def _vmem_capacity_bytes():
    try:
        cap = int(pltpu.get_tpu_info().vmem_capacity_bytes)
        if cap > 0:
            return cap
    except Exception:
        pass
    return 64 * 1024 * 1024                      # conservative fallback (v7x per-TC)


def _per_step_bytes(b_tile, C, simg, slack, cbytes):
    """Explicit per-grid-step VMEM estimate (used only to size the batch tile)."""
    L = b_tile * simg
    io = 2 * 2 * b_tile * C * simg * 4           # in + out blocks, double-buffered fp32
    msk = 2 * L * 4                              # mask block, double-buffered
    pad = C * (L + 2 * slack) * 4                # packed/padded activation scratch
    col = 2 * 3 * C * L * cbytes                 # two (3C, L) im2col chunk buffers
    vals = 6 * C * L * 4                         # live fp32 values (x_pk, h, t, sfb, ...)
    wts = 2 * (2 * 9 * C * C + C * C + 2 * C) * 4
    return io + msk + pad + col + vals + wts


def _pick_batch_tile(n, C, simg, slack, cbytes, budget):
    ub = min(n, 128)                             # bound trace-time unrolling
    if n >= 2:
        ub = min(ub, -(-n // 2))                 # force >= 2 grid steps (v7x megacore)
    t = max(ub, 1)
    while t > 1 and _per_step_bytes(t, C, simg, slack, cbytes) > budget:
        t -= 1
    return t


def ffc_resblock(x_nchw, params, res_scale=1.0, compute_dtype=jnp.bfloat16):
    """Pallas TPU implementation of FFCResBlock.forward (default config).

    compute_dtype is the dtype of the MXU matmul operands (weights + im2col chunks);
    bfloat16 (default) gives ~2x MXU throughput and half the im2col store traffic on
    v5e/v6e/v7x while accumulation, biases, ReLU and the residual adds stay fp32.
    Falls back to fp32 operands when C is not a multiple of 16 (keeps im2col row
    blocks packed-sublane aligned; exact semantics).
    """
    w1, b1, w2, b2, w3, b3 = params
    N, C, H, W = x_nchw.shape
    if C % 16 != 0:
        compute_dtype = jnp.float32
    cbytes = jnp.dtype(compute_dtype).itemsize

    Hp, Wp = H + 2, W + 2
    Limg = Hp * Wp
    simg = -(-Limg // 128) * 128                 # per-image lane stride (128-aligned)
    slack = -(-(Wp + 1) // 128) * 128            # halo covering the +/-(Wp+1) tap reads

    # ---- generation-aware VMEM sizing and batch tiling ----
    cap = _vmem_capacity_bytes()
    budget = max(int(cap * 0.62), 8 << 20)
    b_tile = _pick_batch_tile(N, C, simg, slack, cbytes, budget)
    G = -(-N // b_tile)
    Npad = G * b_tile
    L = b_tile * simg

    # ---- host-side weight/bias repacking (one-time algebra) ----
    # (O, I, 3, 3) -> (O, 9*I), column index (ky*3+kx)*C + i  (matches im2col ordering)
    w1s = jnp.transpose(w1, (0, 2, 3, 1)).reshape(C, 9 * C).astype(compute_dtype)
    w2s = jnp.transpose(w2, (0, 2, 3, 1)).reshape(C, 9 * C).astype(compute_dtype)
    # SFB 1x1 conv over concat([s, s]): both halves contract the same s -> pre-add.
    w3m = w3.reshape(C, 2 * C).astype(jnp.float32)
    w3sum = w3m[:, :C] + w3m[:, C:]
    b1c = b1.reshape(C, 1).astype(jnp.float32)
    b3p = (b3.astype(jnp.float32) + w3sum @ b2.astype(jnp.float32)).reshape(C, 1)
    w3c = w3sum.astype(compute_dtype)

    # ---- host layout: zero-pad only (no transposes); kernel does the lane packing ----
    xp = jnp.pad(x_nchw.astype(jnp.float32),
                 ((0, Npad - N), (0, 0), (1, 1), (1, 1))).reshape(Npad, C, Limg)

    # Interior mask (1 for real pixels, 0 for padded-border and stride-gap lanes).
    rr = jnp.arange(Hp)[:, None]
    cc = jnp.arange(Wp)[None, :]
    m_img = ((rr >= 1) & (rr <= H) & (cc >= 1) & (cc <= W)).astype(jnp.float32)
    m_img = jnp.pad(m_img.reshape(Limg), (0, simg - Limg))
    mask = jnp.tile(m_img, b_tile).reshape(1, L)

    kernel = functools.partial(
        _ffc_resblock_kernel, b_tile=b_tile, Limg=Limg, simg=simg, Wp=Wp,
        slack=slack, L=L, res_scale=float(res_scale), compute_dtype=compute_dtype)

    per_step = _per_step_bytes(b_tile, C, simg, slack, cbytes)
    vmem_limit = int(min(cap - (2 << 20), max(2 * per_step + (8 << 20), 64 << 20)))

    out = pl.pallas_call(
        kernel,
        out_shape=jax.ShapeDtypeStruct((Npad, C, Limg), jnp.float32),
        grid_spec=pltpu.PrefetchScalarGridSpec(
            num_scalar_prefetch=0,
            grid=(G,),
            in_specs=[
                pl.BlockSpec((b_tile, C, Limg), lambda g: (g, 0, 0)),  # padded images
                pl.BlockSpec((1, L), lambda g: (0, 0)),                # interior mask
                pl.BlockSpec((C, 9 * C), lambda g: (0, 0)),            # conv1 weight
                pl.BlockSpec((C, 1), lambda g: (0, 0)),                # conv1 bias
                pl.BlockSpec((C, 9 * C), lambda g: (0, 0)),            # conv2 weight
                pl.BlockSpec((C, C), lambda g: (0, 0)),                # w3a + w3b
                pl.BlockSpec((C, 1), lambda g: (0, 0)),                # b3 + w3sum @ b2
            ],
            out_specs=pl.BlockSpec((b_tile, C, Limg), lambda g: (g, 0, 0)),
            scratch_shapes=[
                pltpu.VMEM((C, L + 2 * slack), jnp.float32),           # packed/padded act
                pltpu.VMEM((3 * C, L), compute_dtype),                 # im2col chunk A
                pltpu.VMEM((3 * C, L), compute_dtype),                 # im2col chunk B
            ],
        ),
        compiler_params=pltpu.CompilerParams(
            dimension_semantics=("parallel",),
            vmem_limit_bytes=vmem_limit),
    )(xp, mask, w1s, b1c, w2s, w3c, b3p)

    out = out.reshape(Npad, C, Hp, Wp)
    return out[:N, :, 1:H + 1, 1:W + 1]


# ------------------------- pure-JAX reference (NCHW, PyTorch conv semantics) ----------
def _conv2d_nchw(x, w, b=None, padding=0):
    y = jax.lax.conv_general_dilated(
        x, w, window_strides=(1, 1),
        padding=[(padding, padding), (padding, padding)],
        dimension_numbers=("NCHW", "OIHW", "NCHW"))
    if b is not None:
        y = y + b[None, :, None, None]
    return y


def ref_ffc_resblock(x, params, res_scale=1.0):
    w1, b1, w2, b2, w3, b3 = params
    h = _conv2d_nchw(x, w1, b1, padding=1)
    h = jnp.maximum(h, 0.0)
    h = _conv2d_nchw(h, w2, b2, padding=1)
    s = h + x                                     # SpatialTransform residual
    cat = jnp.concatenate([s, s], axis=1)         # SFB: spatial branch used twice
    sfb = _conv2d_nchw(cat, w3, b3, padding=0)
    return sfb * res_scale + x


if __name__ == "__main__":
    # small shapes: batch=2, n_feats=4, spatial=16x16, kernel_size=3
    N, C, H, W = 2, 4, 16, 16
    key = jax.random.PRNGKey(0)
    ks = jax.random.split(key, 7)
    sc = 0.1
    w1 = jax.random.normal(ks[0], (C, C, 3, 3), jnp.float32) * sc
    b1 = jax.random.normal(ks[1], (C,), jnp.float32) * sc
    w2 = jax.random.normal(ks[2], (C, C, 3, 3), jnp.float32) * sc
    b2 = jax.random.normal(ks[3], (C,), jnp.float32) * sc
    w3 = jax.random.normal(ks[4], (C, 2 * C, 1, 1), jnp.float32) * sc
    b3 = jax.random.normal(ks[5], (C,), jnp.float32) * sc
    params = (w1, b1, w2, b2, w3, b3)

    x = jax.random.normal(ks[6], (N, C, H, W), jnp.float32)

    ref = ref_ffc_resblock(x, params, res_scale=1.0)

    # Explicit fp32-operand path (exact semantics).
    out = jax.block_until_ready(
        ffc_resblock(x, params, res_scale=1.0, compute_dtype=jnp.float32))
    assert out.shape == ref.shape == (N, C, H, W)
    assert jnp.allclose(out, ref, atol=2e-4, rtol=2e-4), (
        float(jnp.max(jnp.abs(out - ref))))

    # Default path (bf16 MXU operands when C % 16 == 0; here C=4 so it runs fp32),
    # checked with the loose bf16 tolerance so larger-C runs also pass.
    out_def = jax.block_until_ready(ffc_resblock(x, params, res_scale=1.0))
    assert jnp.allclose(out_def, ref, atol=5e-2, rtol=5e-2), (
        float(jnp.max(jnp.abs(out_def - ref))))

    print("KERNEL_OK")
</pallas_src>

<mosaic_0001>
module attributes {stable_mosaic.version = 11 : i64} {
  func.func @_ffc_resblock_kernel(%arg0: i32, %arg1: memref<1x4x324xf32, #tpu.memory_space<vmem>>, %arg2: memref<1x384xf32, #tpu.memory_space<vmem>>, %arg3: memref<4x36xf32, #tpu.memory_space<vmem>>, %arg4: memref<4x1xf32, #tpu.memory_space<vmem>>, %arg5: memref<4x36xf32, #tpu.memory_space<vmem>>, %arg6: memref<4x4xf32, #tpu.memory_space<vmem>>, %arg7: memref<4x1xf32, #tpu.memory_space<vmem>>, %arg8: memref<1x4x324xf32, #tpu.memory_space<vmem>>, %arg9: memref<4x640xf32, #tpu.memory_space<vmem>>, %arg10: memref<12x384xf32, #tpu.memory_space<vmem>>, %arg11: memref<12x384xf32, #tpu.memory_space<vmem>>) attributes {dimension_semantics = [#tpu.dimension_semantics<parallel>], iteration_bounds = array<i64: 2>, scalar_prefetch = 0 : i64, scratch_operands = 3 : i64, tpu.core_type = #tpu.core_type<tc>, window_params = [{transform_indices = @transform_0, window_bounds = array<i64: 1, 4, 324>}, {pipeline_mode = #tpu.pipeline_mode<synchronous>, transform_indices = @transform_1, window_bounds = array<i64: 1, 384>}, {pipeline_mode = #tpu.pipeline_mode<synchronous>, transform_indices = @transform_2, window_bounds = array<i64: 4, 36>}, {pipeline_mode = #tpu.pipeline_mode<synchronous>, transform_indices = @transform_3, window_bounds = array<i64: 4, 1>}, {pipeline_mode = #tpu.pipeline_mode<synchronous>, transform_indices = @transform_4, window_bounds = array<i64: 4, 36>}, {pipeline_mode = #tpu.pipeline_mode<synchronous>, transform_indices = @transform_5, window_bounds = array<i64: 4, 4>}, {pipeline_mode = #tpu.pipeline_mode<synchronous>, transform_indices = @transform_6, window_bounds = array<i64: 4, 1>}, {transform_indices = @transform_7, window_bounds = array<i64: 1, 4, 324>}]} {
    %cst = arith.constant 0.000000e+00 : f32
    %0 = vector.broadcast %cst : f32 to vector<4x128xf32>
    %c0 = arith.constant 0 : index
    %c0_0 = arith.constant 0 : index
    %1 = vector.load %arg9[%c0, %c0_0] : memref<4x640xf32, #tpu.memory_space<vmem>>, vector<4x128xf32>
    tpu.vector_store %arg9[%c0, %c0_0], %0 {strides = array<i32>} : memref<4x640xf32, #tpu.memory_space<vmem>>, vector<4x128xf32>,
    %c0_1 = arith.constant 0 : index
    %c512 = arith.constant 512 : index
    %2 = vector.load %arg9[%c0_1, %c512] : memref<4x640xf32, #tpu.memory_space<vmem>>, vector<4x128xf32>
    tpu.vector_store %arg9[%c0_1, %c512], %0 {strides = array<i32>} : memref<4x640xf32, #tpu.memory_space<vmem>>, vector<4x128xf32>,
    %cst_2 = arith.constant 0.000000e+00 : f32
    %3 = vector.broadcast %cst_2 : f32 to vector<4x60xf32>
    %c0_3 = arith.constant 0 : index
    %c0_4 = arith.constant 0 : index
    %c0_5 = arith.constant 0 : index
    %4 = vector.load %arg1[%c0_3, %c0_4, %c0_5] : memref<1x4x324xf32, #tpu.memory_space<vmem>>, vector<1x4x324xf32>
    %5 = vector.shape_cast %4 : vector<1x4x324xf32> to vector<4x324xf32>
    %c0_6 = arith.constant 0 : index
    %c128 = arith.constant 128 : index
    %6 = vector.load %arg9[%c0_6, %c128] : memref<4x640xf32, #tpu.memory_space<vmem>>, vector<4x324xf32>
    tpu.vector_store %arg9[%c0_6, %c128], %5 {strides = array<i32>} : memref<4x640xf32, #tpu.memory_space<vmem>>, vector<4x324xf32>,
    %c0_7 = arith.constant 0 : index
    %c452 = arith.constant 452 : index
    %7 = vector.load %arg9[%c0_7, %c452] : memref<4x640xf32, #tpu.memory_space<vmem>>, vector<4x60xf32>
    tpu.vector_store %arg9[%c0_7, %c452], %3 {strides = array<i32>} : memref<4x640xf32, #tpu.memory_space<vmem>>, vector<4x60xf32>,
    %c0_8 = arith.constant 0 : index
    %c128_9 = arith.constant 128 : index
    %8 = vector.load %arg9[%c0_8, %c128_9] : memref<4x640xf32, #tpu.memory_space<vmem>>, vector<4x384xf32>
    %c0_10 = arith.constant 0 : index
    %c0_11 = arith.constant 0 : index
    %9 = vector.load %arg2[%c0_10, %c0_11] : memref<1x384xf32, #tpu.memory_space<vmem>>, vector<1x384xf32>
    %c0_12 = arith.constant 0 : index
    %c109 = arith.constant 109 : index
    %10 = vector.load %arg9[%c0_12, %c109] : memref<4x640xf32, #tpu.memory_space<vmem>>, vector<4x384xf32>
    %c0_13 = arith.constant 0 : index
    %c0_14 = arith.constant 0 : index
    %11 = vector.load %arg10[%c0_13, %c0_14] : memref<12x384xf32, #tpu.memory_space<vmem>>, vector<4x384xf32>
    tpu.vector_store %arg10[%c0_13, %c0_14], %10 {strides = array<i32>} : memref<12x384xf32, #tpu.memory_space<vmem>>, vector<4x384xf32>,
    %c0_15 = arith.constant 0 : index
    %c110 = arith.constant 110 : index
    %12 = vector.load %arg9[%c0_15, %c110] : memref<4x640xf32, #tpu.memory_space<vmem>>, vector<4x384xf32>
    %c4 = arith.constant 4 : index
    %c0_16 = arith.constant 0 : index
    %13 = vector.load %arg10[%c4, %c0_16] : memref<12x384xf32, #tpu.memory_space<vmem>>, vector<4x384xf32>
    tpu.vector_store %arg10[%c4, %c0_16], %12 {strides = array<i32>} : memref<12x384xf32, #tpu.memory_space<vmem>>, vector<4x384xf32>,
    %c0_17 = arith.constant 0 : index
    %c111 = arith.constant 111 : index
    %14 = vector.load %arg9[%c0_17, %c111] : memref<4x640xf32, #tpu.memory_space<vmem>>, vector<4x384xf32>
    %c8 = arith.constant 8 : index
    %c0_18 = arith.constant 0 : index
    %15 = vector.load %arg10[%c8, %c0_18] : memref<12x384xf32, #tpu.memory_space<vmem>>, vector<4x384xf32>
    tpu.vector_store %arg10[%c8, %c0_18], %14 {strides = array<i32>} : memref<12x384xf32, #tpu.memory_space<vmem>>, vector<4x384xf32>,
    %c0_19 = arith.constant 0 : index
    %c0_20 = arith.constant 0 : index
    %16 = vector.load %arg3[%c0_19, %c0_20] : memref<4x36xf32, #tpu.memory_space<vmem>>, vector<4x12xf32>
    %c0_21 = arith.constant 0 : index
    %c0_22 = arith.constant 0 : index
    %17 = vector.load %arg10[%c0_21, %c0_22] : memref<12x384xf32, #tpu.memory_space<vmem>>, vector<12x384xf32>
    %cst_23 = arith.constant dense<0.000000e+00> : vector<4x384xf32>
    %18 = tpu.matmul %16, %17, %cst_23 {dimension_numbers = #tpu.dot_dimension_numbers<[1], [0], [0], [1], [0, 0, 1, 1], [], []>} : vector<4x12xf32>, vector<12x384xf32>, vector<4x384xf32> -> vector<4x384xf32>
    %c0_24 = arith.constant 0 : index
    %c127 = arith.constant 127 : index
    %19 = vector.load %arg9[%c0_24, %c127] : memref<4x640xf32, #tpu.memory_space<vmem>>, vector<4x384xf32>
    %c0_25 = arith.constant 0 : index
    %c0_26 = arith.constant 0 : index
    %20 = vector.load %arg11[%c0_25, %c0_26] : memref<12x384xf32, #tpu.memory_space<vmem>>, vector<4x384xf32>
    tpu.vector_store %arg11[%c0_25, %c0_26], %19 {strides = array<i32>} : memref<12x384xf32, #tpu.memory_space<vmem>>, vector<4x384xf32>,
    %c0_27 = arith.constant 0 : index
    %c128_28 = arith.constant 128 : index
    %21 = vector.load %arg9[%c0_27, %c128_28] : memref<4x640xf32, #tpu.memory_space<vmem>>, vector<4x384xf32>
    %c4_29 = arith.constant 4 : index
    %c0_30 = arith.constant 0 : index
    %22 = vector.load %arg11[%c4_29, %c0_30] : memref<12x384xf32, #tpu.memory_space<vmem>>, vector<4x384xf32>
    tpu.vector_store %arg11[%c4_29, %c0_30], %21 {strides = array<i32>} : memref<12x384xf32, #tpu.memory_space<vmem>>, vector<4x384xf32>,
    %c0_31 = arith.constant 0 : index
    %c129 = arith.constant 129 : index
    %23 = vector.load %arg9[%c0_31, %c129] : memref<4x640xf32, #tpu.memory_space<vmem>>, vector<4x384xf32>
    %c8_32 = arith.constant 8 : index
    %c0_33 = arith.constant 0 : index
    %24 = vector.load %arg11[%c8_32, %c0_33] : memref<12x384xf32, #tpu.memory_space<vmem>>, vector<4x384xf32>
    tpu.vector_store %arg11[%c8_32, %c0_33], %23 {strides = array<i32>} : memref<12x384xf32, #tpu.memory_space<vmem>>, vector<4x384xf32>,
    %c0_34 = arith.constant 0 : index
    %c12 = arith.constant 12 : index
    %25 = vector.load %arg3[%c0_34, %c12] : memref<4x36xf32, #tpu.memory_space<vmem>>, vector<4x12xf32>
    %c0_35 = arith.constant 0 : index
    %c0_36 = arith.constant 0 : index
    %26 = vector.load %arg11[%c0_35, %c0_36] : memref<12x384xf32, #tpu.memory_space<vmem>>, vector<12x384xf32>
    %cst_37 = arith.constant dense<0.000000e+00> : vector<4x384xf32>
    %27 = tpu.matmul %25, %26, %cst_37 {dimension_numbers = #tpu.dot_dimension_numbers<[1], [0], [0], [1], [0, 0, 1, 1], [], []>} : vector<4x12xf32>, vector<12x384xf32>, vector<4x384xf32> -> vector<4x384xf32>
    %28 = arith.addf %18, %27 : vector<4x384xf32>
    %c0_38 = arith.constant 0 : index
    %c145 = arith.constant 145 : index
    %29 = vector.load %arg9[%c0_38, %c145] : memref<4x640xf32, #tpu.memory_space<vmem>>, vector<4x384xf32>
    %c0_39 = arith.constant 0 : index
    %c0_40 = arith.constant 0 : index
    %30 = vector.load %arg10[%c0_39, %c0_40] : memref<12x384xf32, #tpu.memory_space<vmem>>, vector<4x384xf32>
    tpu.vector_store %arg10[%c0_39, %c0_40], %29 {strides = array<i32>} : memref<12x384xf32, #tpu.memory_space<vmem>>, vector<4x384xf32>,
    %c0_41 = arith.constant 0 : index
    %c146 = arith.constant 146 : index
    %31 = vector.load %arg9[%c0_41, %c146] : memref<4x640xf32, #tpu.memory_space<vmem>>, vector<4x384xf32>
    %c4_42 = arith.constant 4 : index
    %c0_43 = arith.constant 0 : index
    %32 = vector.load %arg10[%c4_42, %c0_43] : memref<12x384xf32, #tpu.memory_space<vmem>>, vector<4x384xf32>
    tpu.vector_store %arg10[%c4_42, %c0_43], %31 {strides = array<i32>} : memref<12x384xf32, #tpu.memory_space<vmem>>, vector<4x384xf32>,
    %c0_44 = arith.constant 0 : index
    %c147 = arith.constant 147 : index
    %33 = vector.load %arg9[%c0_44, %c147] : memref<4x640xf32, #tpu.memory_space<vmem>>, vector<4x384xf32>
    %c8_45 = arith.constant 8 : index
    %c0_46 = arith.constant 0 : index
    %34 = vector.load %arg10[%c8_45, %c0_46] : memref<12x384xf32, #tpu.memory_space<vmem>>, vector<4x384xf32>
    tpu.vector_store %arg10[%c8_45, %c0_46], %33 {strides = array<i32>} : memref<12x384xf32, #tpu.memory_space<vmem>>, vector<4x384xf32>,
    %c0_47 = arith.constant 0 : index
    %c24 = arith.constant 24 : index
    %35 = vector.load %arg3[%c0_47, %c24] : memref<4x36xf32, #tpu.memory_space<vmem>>, vector<4x12xf32>
    %c0_48 = arith.constant 0 : index
    %c0_49 = arith.constant 0 : index
    %36 = vector.load %arg10[%c0_48, %c0_49] : memref<12x384xf32, #tpu.memory_space<vmem>>, vector<12x384xf32>
    %cst_50 = arith.constant dense<0.000000e+00> : vector<4x384xf32>
    %37 = tpu.matmul %35, %36, %cst_50 {dimension_numbers = #tpu.dot_dimension_numbers<[1], [0], [0], [1], [0, 0, 1, 1], [], []>} : vector<4x12xf32>, vector<12x384xf32>, vector<4x384xf32> -> vector<4x384xf32>
    %38 = arith.addf %28, %37 : vector<4x384xf32>
    %c0_51 = arith.constant 0 : index
    %c0_52 = arith.constant 0 : index
    %39 = vector.load %arg4[%c0_51, %c0_52] : memref<4x1xf32, #tpu.memory_space<vmem>>, vector<4x1xf32>
    %40 = vector.broadcast %39 : vector<4x1xf32> to vector<4x384xf32>
    %41 = arith.addf %38, %40 : vector<4x384xf32>
    %cst_53 = arith.constant 0.000000e+00 : f32
    %42 = vector.broadcast %cst_53 : f32 to vector<4x384xf32>
    %43 = arith.maximumf %41, %42 : vector<4x384xf32>
    %44 = vector.broadcast %9 : vector<1x384xf32> to vector<4x384xf32>
    %45 = arith.mulf %43, %44 : vector<4x384xf32>
    %c0_54 = arith.constant 0 : index
    %c128_55 = arith.constant 128 : index
    %46 = vector.load %arg9[%c0_54, %c128_55] : memref<4x640xf32, #tpu.memory_space<vmem>>, vector<4x384xf32>
    tpu.vector_store %arg9[%c0_54, %c128_55], %45 {strides = array<i32>} : memref<4x640xf32, #tpu.memory_space<vmem>>, vector<4x384xf32>,
    %c0_56 = arith.constant 0 : index
    %c109_57 = arith.constant 109 : index
    %47 = vector.load %arg9[%c0_56, %c109_57] : memref<4x640xf32, #tpu.memory_space<vmem>>, vector<4x384xf32>
    %c0_58 = arith.constant 0 : index
    %c0_59 = arith.constant 0 : index
    %48 = vector.load %arg10[%c0_58, %c0_59] : memref<12x384xf32, #tpu.memory_space<vmem>>, vector<4x384xf32>
    tpu.vector_store %arg10[%c0_58, %c0_59], %47 {strides = array<i32>} : memref<12x384xf32, #tpu.memory_space<vmem>>, vector<4x384xf32>,
    %c0_60 = arith.constant 0 : index
    %c110_61 = arith.constant 110 : index
    %49 = vector.load %arg9[%c0_60, %c110_61] : memref<4x640xf32, #tpu.memory_space<vmem>>, vector<4x384xf32>
    %c4_62 = arith.constant 4 : index
    %c0_63 = arith.constant 0 : index
    %50 = vector.load %arg10[%c4_62, %c0_63] : memref<12x384xf32, #tpu.memory_space<vmem>>, vector<4x384xf32>
    tpu.vector_store %arg10[%c4_62, %c0_63], %49 {strides = array<i32>} : memref<12x384xf32, #tpu.memory_space<vmem>>, vector<4x384xf32>,
    %c0_64 = arith.constant 0 : index
    %c111_65 = arith.constant 111 : index
    %51 = vector.load %arg9[%c0_64, %c111_65] : memref<4x640xf32, #tpu.memory_space<vmem>>, vector<4x384xf32>
    %c8_66 = arith.constant 8 : index
    %c0_67 = arith.constant 0 : index
    %52 = vector.load %arg10[%c8_66, %c0_67] : memref<12x384xf32, #tpu.memory_space<vmem>>, vector<4x384xf32>
    tpu.vector_store %arg10[%c8_66, %c0_67], %51 {strides = array<i32>} : memref<12x384xf32, #tpu.memory_space<vmem>>, vector<4x384xf32>,
    %c0_68 = arith.constant 0 : index
    %c0_69 = arith.constant 0 : index
    %53 = vector.load %arg5[%c0_68, %c0_69] : memref<4x36xf32, #tpu.memory_space<vmem>>, vector<4x12xf32>
    %c0_70 = arith.constant 0 : index
    %c0_71 = arith.constant 0 : index
    %54 = vector.load %arg10[%c0_70, %c0_71] : memref<12x384xf32, #tpu.memory_space<vmem>>, vector<12x384xf32>
    %cst_72 = arith.constant dense<0.000000e+00> : vector<4x384xf32>
    %55 = tpu.matmul %53, %54, %cst_72 {dimension_numbers = #tpu.dot_dimension_numbers<[1], [0], [0], [1], [0, 0, 1, 1], [], []>} : vector<4x12xf32>, vector<12x384xf32>, vector<4x384xf32> -> vector<4x384xf32>
    %c0_73 = arith.constant 0 : index
    %c127_74 = arith.constant 127 : index
    %56 = vector.load %arg9[%c0_73, %c127_74] : memref<4x640xf32, #tpu.memory_space<vmem>>, vector<4x384xf32>
    %c0_75 = arith.constant 0 : index
    %c0_76 = arith.constant 0 : index
    %57 = vector.load %arg11[%c0_75, %c0_76] : memref<12x384xf32, #tpu.memory_space<vmem>>, vector<4x384xf32>
    tpu.vector_store %arg11[%c0_75, %c0_76], %56 {strides = array<i32>} : memref<12x384xf32, #tpu.memory_space<vmem>>, vector<4x384xf32>,
    %c0_77 = arith.constant 0 : index
    %c128_78 = arith.constant 128 : index
    %58 = vector.load %arg9[%c0_77, %c128_78] : memref<4x640xf32, #tpu.memory_space<vmem>>, vector<4x384xf32>
    %c4_79 = arith.constant 4 : index
    %c0_80 = arith.constant 0 : index
    %59 = vector.load %arg11[%c4_79, %c0_80] : memref<12x384xf32, #tpu.memory_space<vmem>>, vector<4x384xf32>
    tpu.vector_store %arg11[%c4_79, %c0_80], %58 {strides = array<i32>} : memref<12x384xf32, #tpu.memory_space<vmem>>, vector<4x384xf32>,
    %c0_81 = arith.constant 0 : index
    %c129_82 = arith.constant 129 : index
    %60 = vector.load %arg9[%c0_81, %c129_82] : memref<4x640xf32, #tpu.memory_space<vmem>>, vector<4x384xf32>
    %c8_83 = arith.constant 8 : index
    %c0_84 = arith.constant 0 : index
    %61 = vector.load %arg11[%c8_83, %c0_84] : memref<12x384xf32, #tpu.memory_space<vmem>>, vector<4x384xf32>
    tpu.vector_store %arg11[%c8_83, %c0_84], %60 {strides = array<i32>} : memref<12x384xf32, #tpu.memory_space<vmem>>, vector<4x384xf32>,
    %c0_85 = arith.constant 0 : index
    %c12_86 = arith.constant 12 : index
    %62 = vector.load %arg5[%c0_85, %c12_86] : memref<4x36xf32, #tpu.memory_space<vmem>>, vector<4x12xf32>
    %c0_87 = arith.constant 0 : index
    %c0_88 = arith.constant 0 : index
    %63 = vector.load %arg11[%c0_87, %c0_88] : memref<12x384xf32, #tpu.memory_space<vmem>>, vector<12x384xf32>
    %cst_89 = arith.constant dense<0.000000e+00> : vector<4x384xf32>
    %64 = tpu.matmul %62, %63, %cst_89 {dimension_numbers = #tpu.dot_dimension_numbers<[1], [0], [0], [1], [0, 0, 1, 1], [], []>} : vector<4x12xf32>, vector<12x384xf32>, vector<4x384xf32> -> vector<4x384xf32>
    %65 = arith.addf %55, %64 : vector<4x384xf32>
    %c0_90 = arith.constant 0 : index
    %c145_91 = arith.constant 145 : index
    %66 = vector.load %arg9[%c0_90, %c145_91] : memref<4x640xf32, #tpu.memory_space<vmem>>, vector<4x384xf32>
    %c0_92 = arith.constant 0 : index
    %c0_93 = arith.constant 0 : index
    %67 = vector.load %arg10[%c0_92, %c0_93] : memref<12x384xf32, #tpu.memory_space<vmem>>, vector<4x384xf32>
    tpu.vector_store %arg10[%c0_92, %c0_93], %66 {strides = array<i32>} : memref<12x384xf32, #tpu.memory_space<vmem>>, vector<4x384xf32>,
    %c0_94 = arith.constant 0 : index
    %c146_95 = arith.constant 146 : index
    %68 = vector.load %arg9[%c0_94, %c146_95] : memref<4x640xf32, #tpu.memory_space<vmem>>, vector<4x384xf32>
    %c4_96 = arith.constant 4 : index
    %c0_97 = arith.constant 0 : index
    %69 = vector.load %arg10[%c4_96, %c0_97] : memref<12x384xf32, #tpu.memory_space<vmem>>, vector<4x384xf32>
    tpu.vector_store %arg10[%c4_96, %c0_97], %68 {strides = array<i32>} : memref<12x384xf32, #tpu.memory_space<vmem>>, vector<4x384xf32>,
    %c0_98 = arith.constant 0 : index
    %c147_99 = arith.constant 147 : index
    %70 = vector.load %arg9[%c0_98, %c147_99] : memref<4x640xf32, #tpu.memory_space<vmem>>, vector<4x384xf32>
    %c8_100 = arith.constant 8 : index
    %c0_101 = arith.constant 0 : index
    %71 = vector.load %arg10[%c8_100, %c0_101] : memref<12x384xf32, #tpu.memory_space<vmem>>, vector<4x384xf32>
    tpu.vector_store %arg10[%c8_100, %c0_101], %70 {strides = array<i32>} : memref<12x384xf32, #tpu.memory_space<vmem>>, vector<4x384xf32>,
    %c0_102 = arith.constant 0 : index
    %c24_103 = arith.constant 24 : index
    %72 = vector.load %arg5[%c0_102, %c24_103] : memref<4x36xf32, #tpu.memory_space<vmem>>, vector<4x12xf32>
    %c0_104 = arith.constant 0 : index
    %c0_105 = arith.constant 0 : index
    %73 = vector.load %arg10[%c0_104, %c0_105] : memref<12x384xf32, #tpu.memory_space<vmem>>, vector<12x384xf32>
    %cst_106 = arith.constant dense<0.000000e+00> : vector<4x384xf32>
    %74 = tpu.matmul %72, %73, %cst_106 {dimension_numbers = #tpu.dot_dimension_numbers<[1], [0], [0], [1], [0, 0, 1, 1], [], []>} : vector<4x12xf32>, vector<12x384xf32>, vector<4x384xf32> -> vector<4x384xf32>
    %75 = arith.addf %65, %74 : vector<4x384xf32>
    %76 = arith.addf %75, %8 : vector<4x384xf32>
    %c0_107 = arith.constant 0 : index
    %c0_108 = arith.constant 0 : index
    %77 = vector.load %arg6[%c0_107, %c0_108] : memref<4x4xf32, #tpu.memory_space<vmem>>, vector<4x4xf32>
    %cst_109 = arith.constant dense<0.000000e+00> : vector<4x384xf32>
    %78 = tpu.matmul %77, %76, %cst_109 {dimension_numbers = #tpu.dot_dimension_numbers<[1], [0], [0], [1], [0, 0, 1, 1], [], []>} : vector<4x4xf32>, vector<4x384xf32>, vector<4x384xf32> -> vector<4x384xf32>
    %c0_110 = arith.constant 0 : index
    %c0_111 = arith.constant 0 : index
    %79 = vector.load %arg7[%c0_110, %c0_111] : memref<4x1xf32, #tpu.memory_space<vmem>>, vector<4x1xf32>
    %80 = vector.broadcast %79 : vector<4x1xf32> to vector<4x384xf32>
    %81 = arith.addf %78, %80 : vector<4x384xf32>
    %82 = arith.addf %81, %8 : vector<4x384xf32>
    %83 = vector.extract_strided_slice %82 {offsets = [0, 0], sizes = [4, 324], strides = [1, 1]} : vector<4x384xf32> to vector<4x324xf32>
    %c0_112 = arith.constant 0 : index
    %c0_113 = arith.constant 0 : index
    %c0_114 = arith.constant 0 : index
    %84 = vector.load %arg8[%c0_112, %c0_113, %c0_114] : memref<1x4x324xf32, #tpu.memory_space<vmem>>, vector<1x4x324xf32>
    %85 = vector.shape_cast %84 : vector<1x4x324xf32> to vector<4x324xf32>
    %86 = vector.shape_cast %83 : vector<4x324xf32> to vector<1x4x324xf32>
    tpu.vector_store %arg8[%c0_112, %c0_113, %c0_114], %86 {strides = array<i32>} : memref<1x4x324xf32, #tpu.memory_space<vmem>>, vector<1x4x324xf32>,
    return
  }
  func.func @transform_0(%arg0: i32) -> (i32, i32, i32) {
    %c0_i32 = arith.constant 0 : i32
    %c0_i32_0 = arith.constant 0 : i32
    %c0_i32_1 = arith.constant 0 : i32
    return %arg0, %c0_i32, %c0_i32_0 : i32, i32, i32
  }
  func.func @transform_1(%arg0: i32) -> (i32, i32) {
    %c0_i32 = arith.constant 0 : i32
    %c0_i32_0 = arith.constant 0 : i32
    %c0_i32_1 = arith.constant 0 : i32
    return %c0_i32, %c0_i32_0 : i32, i32
  }
  func.func @transform_2(%arg0: i32) -> (i32, i32) {
    %c0_i32 = arith.constant 0 : i32
    %c0_i32_0 = arith.constant 0 : i32
    %c0_i32_1 = arith.constant 0 : i32
    return %c0_i32, %c0_i32_0 : i32, i32
  }
  func.func @transform_3(%arg0: i32) -> (i32, i32) {
    %c0_i32 = arith.constant 0 : i32
    %c0_i32_0 = arith.constant 0 : i32
    %c0_i32_1 = arith.constant 0 : i32
    return %c0_i32, %c0_i32_0 : i32, i32
  }
  func.func @transform_4(%arg0: i32) -> (i32, i32) {
    %c0_i32 = arith.constant 0 : i32
    %c0_i32_0 = arith.constant 0 : i32
    %c0_i32_1 = arith.constant 0 : i32
    return %c0_i32, %c0_i32_0 : i32, i32
  }
  func.func @transform_5(%arg0: i32) -> (i32, i32) {
    %c0_i32 = arith.constant 0 : i32
    %c0_i32_0 = arith.constant 0 : i32
    %c0_i32_1 = arith.constant 0 : i32
    return %c0_i32, %c0_i32_0 : i32, i32
  }
  func.func @transform_6(%arg0: i32) -> (i32, i32) {
    %c0_i32 = arith.constant 0 : i32
    %c0_i32_0 = arith.constant 0 : i32
    %c0_i32_1 = arith.constant 0 : i32
    return %c0_i32, %c0_i32_0 : i32, i32
  }
  func.func @transform_7(%arg0: i32) -> (i32, i32, i32) {
    %c0_i32 = arith.constant 0 : i32
    %c0_i32_0 = arith.constant 0 : i32
    %c0_i32_1 = arith.constant 0 : i32
    return %arg0, %c0_i32, %c0_i32_0 : i32, i32, i32
  }
}

</mosaic_0001>

<llo_original>
// kernel: tpu_custom_call.1
$region0: #{tpu_custom_call.1}
  #allocation0 [shape = 'u32[]', space=smem, size = 0x4, offset = 0x4, fixed_abs, tag = 'smem constant byte address 0x4 - core index']
  #allocation1 [shape = 'u32[144,128]{1,0:T(1,128)}', space=vmem, size = 0x12000, scoped, tag = 'internal scratch']
  #allocation2 [shape = 'f32[4,640]{1,0:T(4,128)}', space=vmem, size = 0x2800, scoped, tag = 'scratch operand']
  #allocation3 [shape = 'f32[12,384]{1,0:T(8,128)}', space=vmem, size = 0x6000, scoped, tag = 'scratch operand']
  #allocation4 [shape = 'f32[12,384]{1,0:T(8,128)}', space=vmem, size = 0x6000, scoped, tag = 'scratch operand']
  %s0 = inlined_call_operand.hbm [shape: f32[2,4,324], index: 0, kind: input, shape index: {}]
  %s1 = inlined_call_operand.hbm [shape: f32[1,384], index: 1, kind: input, shape index: {}]
  %s2 = inlined_call_operand.vmem [shape: f32[4,36], index: 2, kind: input, shape index: {}]
  %s3 = inlined_call_operand.vmem [shape: f32[4,1], index: 3, kind: input, shape index: {}]
  %s4 = inlined_call_operand.vmem [shape: f32[4,36], index: 4, kind: input, shape index: {}]
  %s5 = inlined_call_operand.vmem [shape: f32[4,4], index: 5, kind: input, shape index: {}]
  %s6 = inlined_call_operand.vmem [shape: f32[4,1], index: 6, kind: input, shape index: {}]
  %s7 = inlined_call_operand.hbm [shape: f32[2,4,324], index: 7, kind: output, shape index: {}]
  %s8 = sld [smem:[#allocation0]]
  $region69: #{tpu_custom_call.1} parent=0
    _
  %s10 = ssub.s32 1, %s8
  %s11 = scalar_select 0, %s10, %s8
  $region1: #{tpu_custom_call.1} parent=0
    #allocation5 [shape = 'u8[12288]{0}', space=vmem, size = 0x3000, scoped, tag = 'input window, operand 0']
    #allocation6 [shape = 's32[2]{0}', space=sflag, size = 0x8, scoped, tag = 'scoped memory for tpu_custom_call.1']
    #allocation7 [shape = 's32[2]{0}', space=sflag, size = 0x8, scoped, tag = 'scoped memory for tpu_custom_call.1']
    #allocation8 [shape = 'u8[1536]{0}', space=vmem, size = 0x800, scoped, tag = 'input window, operand 1, single buffered']
    #allocation9 [shape = 's32[1]{0}', space=sflag, size = 0x4, scoped, tag = 'scoped memory for tpu_custom_call.1']
    #allocation10 [shape = 'u8[12288]{0}', space=vmem, size = 0x3000, scoped, tag = 'output window, operand 0']
    %12 = vsyncpa [#allocation6], 0
    %s13 = scalar_lea.sflag [#allocation6], 1
    %14 = vsyncpa %s13, 0
    %15 = vsyncpa [#allocation9], 0
    %16 = vsyncpa [#allocation7], 0
    %s17 = scalar_lea.sflag [#allocation7], 1
    %18 = vsyncpa %s17, 0
    loop: start=0, step=1, limit=4
    $region2: #{tpu_custom_call.1} parent=1 // loop_pre_header
      _
    $region3: #{tpu_custom_call.1} parent=1 // loop_header
      %s20 = sphi 0, %s24
      %p21 = scmp.ge.s32.totalorder %s20, 4
      %s30 = sphi 0, %s32
      %s33 = sphi 0, %s30
      %s34 = sphi 0, %s33
      %s50 = sphi 0, %s34
      %s54 = sphi 0, %s54
      %s56 = sphi 0, %s54
      %s57 = sphi 0, %s56
      %s71 = sphi 0, %s57
      %s75 = sphi 0, %s75
      %s77 = sphi 0, %s75
      %s78 = sphi 0, %s77
      %s92 = sphi 0, %s78
      %s96 = sphi 0, %s96
      %s98 = sphi 0, %s96
      %s99 = sphi 0, %s98
      %s113 = sphi 0, %s99
      %s117 = sphi 0, %s117
      %s119 = sphi 0, %s117
      %s120 = sphi 0, %s119
      %s134 = sphi 0, %s120
      %s138 = sphi 0, %s138
      %s140 = sphi 0, %s138
      %s141 = sphi 0, %s140
      %s155 = sphi 0, %s141
      %s159 = sphi 0, %s159
      %s161 = sphi 0, %s159
      %s162 = sphi 0, %s161
      %s176 = sphi 0, %s162
      %s182 = sphi 0, %s184
      %s185 = sphi 0, %s182
      %s186 = sphi 0, %s185
      %s202 = sphi 0, %s186
    $region4: #{tpu_custom_call.1} parent=1 // loop_header_branch
      %23 = sbr.rel (%p21) target = $region8
    $region5: #{tpu_custom_call.1} parent=1 // loop_body
      %s25 = ssub.s32 %s20, 1
      %s26 = ssub.s32 %s20, 2
      %s27 = sadd.s32 %s20, 1
      %s28 = ssub.s32 %s20, %s27
      %p29 = scmp.eq.s32.totalorder %s28, 0
      %s31 = sadd.s32 %s30, 1
      %s32 = scalar_select %p29, %s30, %s31
      %p35 = pneg %p29
      %p36 = scmp.eq.s32.totalorder %s20, 1
      %p37 = por %p35, %p36
      %p38 = scmp.ne.s32.totalorder %s30, %s33
      %p39 = scmp.eq.s32.totalorder %s20, 0
      %p40 = por %p38, %p39
      %p41 = scmp.ne.s32.totalorder %s30, %s33
      %p42 = scmp.eq.s32.totalorder %s25, 1
      %p43 = por %p41, %p42
      %p44 = scmp.ne.s32.totalorder %s33, %s34
      %p45 = scmp.eq.s32.totalorder %s25, 0
      %p46 = por %p44, %p45
      %p47 = scmp.ne.s32.totalorder %s33, %s34
      %p48 = scmp.eq.s32.totalorder %s26, 1
      %p49 = por %p47, %p48
      %p51 = scmp.ne.s32.totalorder %s34, %s50
      %p52 = scmp.eq.s32.totalorder %s26, 0
      %p53 = por %p51, %p52
      %s55 = sadd.s32 %s54, 1
      %p58 = scmp.eq.s32.totalorder %s20, 1
      %p59 = scmp.ne.s32.totalorder %s54, %s56
      %p60 = scmp.eq.s32.totalorder %s20, 0
      %p61 = por %p59, %p60
      %p62 = scmp.ne.s32.totalorder %s54, %s56
      %p63 = scmp.eq.s32.totalorder %s25, 1
      %p64 = por %p62, %p63
      %p65 = scmp.ne.s32.totalorder %s56, %s57
      %p66 = scmp.eq.s32.totalorder %s25, 0
      %p67 = por %p65, %p66
      %p68 = scmp.ne.s32.totalorder %s56, %s57
      %p69 = scmp.eq.s32.totalorder %s26, 1
      %p70 = por %p68, %p69
      %p72 = scmp.ne.s32.totalorder %s57, %s71
      %p73 = scmp.eq.s32.totalorder %s26, 0
      %p74 = por %p72, %p73
      %s76 = sadd.s32 %s75, 1
      %p79 = scmp.eq.s32.totalorder %s20, 1
      %p80 = scmp.ne.s32.totalorder %s75, %s77
      %p81 = scmp.eq.s32.totalorder %s20, 0
      %p82 = por %p80, %p81
      %p83 = scmp.ne.s32.totalorder %s75, %s77
      %p84 = scmp.eq.s32.totalorder %s25, 1
      %p85 = por %p83, %p84
      %p86 = scmp.ne.s32.totalorder %s77, %s78
      %p87 = scmp.eq.s32.totalorder %s25, 0
      %p88 = por %p86, %p87
      %p89 = scmp.ne.s32.totalorder %s77, %s78
      %p90 = scmp.eq.s32.totalorder %s26, 1
      %p91 = por %p89, %p90
      %p93 = scmp.ne.s32.totalorder %s78, %s92
      %p94 = scmp.eq.s32.totalorder %s26, 0
      %p95 = por %p93, %p94
      %s97 = sadd.s32 %s96, 1
      %p100 = scmp.eq.s32.totalorder %s20, 1
      %p101 = scmp.ne.s32.totalorder %s96, %s98
      %p102 = scmp.eq.s32.totalorder %s20, 0
      %p103 = por %p101, %p102
      %p104 = scmp.ne.s32.totalorder %s96, %s98
      %p105 = scmp.eq.s32.totalorder %s25, 1
      %p106 = por %p104, %p105
      %p107 = scmp.ne.s32.totalorder %s98, %s99
      %p108 = scmp.eq.s32.totalorder %s25, 0
      %p109 = por %p107, %p108
      %p110 = scmp.ne.s32.totalorder %s98, %s99
      %p111 = scmp.eq.s32.totalorder %s26, 1
      %p112 = por %p110, %p111
      %p114 = scmp.ne.s32.totalorder %s99, %s113
      %p115 = scmp.eq.s32.totalorder %s26, 0
      %p116 = por %p114, %p115
      %s118 = sadd.s32 %s117, 1
      %p121 = scmp.eq.s32.totalorder %s20, 1
      %p122 = scmp.ne.s32.totalorder %s117, %s119
      %p123 = scmp.eq.s32.totalorder %s20, 0
      %p124 = por %p122, %p123
      %p125 = scmp.ne.s32.totalorder %s117, %s119
      %p126 = scmp.eq.s32.totalorder %s25, 1
      %p127 = por %p125, %p126
      %p128 = scmp.ne.s32.totalorder %s119, %s120
      %p129 = scmp.eq.s32.totalorder %s25, 0
      %p130 = por %p128, %p129
      %p131 = scmp.ne.s32.totalorder %s119, %s120
      %p132 = scmp.eq.s32.totalorder %s26, 1
      %p133 = por %p131, %p132
      %p135 = scmp.ne.s32.totalorder %s120, %s134
      %p136 = scmp.eq.s32.totalorder %s26, 0
      %p137 = por %p135, %p136
      %s139 = sadd.s32 %s138, 1
      %p142 = scmp.eq.s32.totalorder %s20, 1
      %p143 = scmp.ne.s32.totalorder %s138, %s140
      %p144 = scmp.eq.s32.totalorder %s20, 0
      %p145 = por %p143, %p144
      %p146 = scmp.ne.s32.totalorder %s138, %s140
      %p147 = scmp.eq.s32.totalorder %s25, 1
      %p148 = por %p146, %p147
      %p149 = scmp.ne.s32.totalorder %s140, %s141
      %p150 = scmp.eq.s32.totalorder %s25, 0
      %p151 = por %p149, %p150
      %p152 = scmp.ne.s32.totalorder %s140, %s141
      %p153 = scmp.eq.s32.totalorder %s26, 1
      %p154 = por %p152, %p153
      %p156 = scmp.ne.s32.totalorder %s141, %s155
      %p157 = scmp.eq.s32.totalorder %s26, 0
      %p158 = por %p156, %p157
      %s160 = sadd.s32 %s159, 1
      %p163 = scmp.eq.s32.totalorder %s20, 1
      %p164 = scmp.ne.s32.totalorder %s159, %s161
      %p165 = scmp.eq.s32.totalorder %s20, 0
      %p166 = por %p164, %p165
      %p167 = scmp.ne.s32.totalorder %s159, %s161
      %p168 = scmp.eq.s32.totalorder %s25, 1
      %p169 = por %p167, %p168
      %p170 = scmp.ne.s32.totalorder %s161, %s162
      %p171 = scmp.eq.s32.totalorder %s25, 0
      %p172 = por %p170, %p171
      %p173 = scmp.ne.s32.totalorder %s161, %s162
      %p174 = scmp.eq.s32.totalorder %s26, 1
      %p175 = por %p173, %p174
      %p177 = scmp.ne.s32.totalorder %s162, %s176
      %p178 = scmp.eq.s32.totalorder %s26, 0
      %p179 = por %p177, %p178
      %s180 = ssub.s32 %s20, %s27
      %p181 = scmp.eq.s32.totalorder %s180, 0
      %s183 = sadd.s32 %s182, 1
      %s184 = scalar_select %p181, %s182, %s183
      %p187 = pneg %p181
      %p188 = scmp.eq.s32.totalorder %s20, 1
      %p189 = por %p187, %p188
      %p190 = scmp.ne.s32.totalorder %s182, %s185
      %p191 = scmp.eq.s32.totalorder %s20, 0
      %p192 = por %p190, %p191
      %p193 = scmp.ne.s32.totalorder %s182, %s185
      %p194 = scmp.eq.s32.totalorder %s25, 1
      %p195 = por %p193, %p194
      %p196 = scmp.ne.s32.totalorder %s185, %s186
      %p197 = scmp.eq.s32.totalorder %s25, 0
      %p198 = por %p196, %p197
      %p199 = scmp.ne.s32.totalorder %s185, %s186
      %p200 = scmp.eq.s32.totalorder %s26, 1
      %p201 = por %p199, %p200
      %p203 = scmp.ne.s32.totalorder %s186, %s202
      %p204 = scmp.eq.s32.totalorder %s26, 0
      %p205 = por %p203, %p204
      %p206 = scmp.le.s32.totalorder 1, %s20
      %p207 = scmp.lt.s32.totalorder %s20, 3
      %p208 = pnand %p206, %p207
      %p209 = pneg %p208
      // Predicated region
      $region9: #{tpu_custom_call.1} parent=5 // pred_check
        _
      $region10: #{tpu_custom_call.1} parent=5 // pred_check_branch
        %211 = sbr.rel (%p208) target = $region12
      $region11: #{tpu_custom_call.1} parent=5 // pred_region
        %s212 = ssub.s32 %s20, 1
        // Predicated region
        $region13: #{tpu_custom_call.1} parent=11 // pred_check
          %p213 = pneg %p67
        $region14: #{tpu_custom_call.1} parent=11 // pred_check_branch
          %215 = sbr.rel (%p213) target = $region16
        $region15: #{tpu_custom_call.1} parent=11 // pred_region
          %s217 = ssub.s32 48, 48
          %218 = vsyncadd [#allocation9], %s217
          %s220 = sshll.u32 [#allocation8], 4
          %s221 = int_to_ptr.vmem [resolvable:$true] %s220
          %223 = dma.hbm_to_vmem [thread:$0]  %s1, 48, %s221, [#allocation9]
        $region16: #{tpu_custom_call.1} parent=11 // pred_fallthru
          _
        // Predicated region
        $region17: #{tpu_custom_call.1} parent=11 // pred_check
          %p224 = pneg %p88
        $region18: #{tpu_custom_call.1} parent=11 // pred_check_branch
          %226 = sbr.rel (%p224) target = $region20
        $region19: #{tpu_custom_call.1} parent=11 // pred_region
          _
        $region20: #{tpu_custom_call.1} parent=11 // pred_fallthru
          _
        // Predicated region
        $region21: #{tpu_custom_call.1} parent=11 // pred_check
          %p227 = pneg %p109
        $region22: #{tpu_custom_call.1} parent=11 // pred_check_branch
          %229 = sbr.rel (%p227) target = $region24
        $region23: #{tpu_custom_call.1} parent=11 // pred_region
          _
        $region24: #{tpu_custom_call.1} parent=11 // pred_fallthru
          _
        // Predicated region
        $region25: #{tpu_custom_call.1} parent=11 // pred_check
          %p230 = pneg %p130
        $region26: #{tpu_custom_call.1} parent=11 // pred_check_branch
          %232 = sbr.rel (%p230) target = $region28
        $region27: #{tpu_custom_call.1} parent=11 // pred_region
          _
        $region28: #{tpu_custom_call.1} parent=11 // pred_fallthru
          _
        // Predicated region
        $region29: #{tpu_custom_call.1} parent=11 // pred_check
          %p233 = pneg %p151
        $region30: #{tpu_custom_call.1} parent=11 // pred_check_branch
          %235 = sbr.rel (%p233) target = $region32
        $region31: #{tpu_custom_call.1} parent=11 // pred_region
          _
        $region32: #{tpu_custom_call.1} parent=11 // pred_fallthru
          _
        // Predicated region
        $region33: #{tpu_custom_call.1} parent=11 // pred_check
          %p236 = pneg %p172
        $region34: #{tpu_custom_call.1} parent=11 // pred_check_branch
          %238 = sbr.rel (%p236) target = $region36
        $region35: #{tpu_custom_call.1} parent=11 // pred_region
          _
        $region36: #{tpu_custom_call.1} parent=11 // pred_fallthru
          _
      $region12: #{tpu_custom_call.1} parent=5 // pred_fallthru
        _
      %p239 = scmp.lt.s32.totalorder %s20, 2
      // Predicated region
      $region37: #{tpu_custom_call.1} parent=5 // pred_check
        %p240 = pneg %p239
      $region38: #{tpu_custom_call.1} parent=5 // pred_check_branch
        %242 = sbr.rel (%p240) target = $region40
      $region39: #{tpu_custom_call.1} parent=5 // pred_region
        // Predicated region
        $region41: #{tpu_custom_call.1} parent=39 // pred_check
          %p243 = pneg %p40
        $region42: #{tpu_custom_call.1} parent=39 // pred_check_branch
          %245 = sbr.rel (%p243) target = $region44
        $region43: #{tpu_custom_call.1} parent=39 // pred_region
          %s246 = sand.u32 %s30, 1
          %s247 = scalar_lea.sflag [#allocation6], %s246
          %s248 = sand.u32 %s30, 1
          %s249 = smul.addr %s248, 12
          %s250 = scalar_lea.vmem [#allocation5], %s249
          %s252 = ssub.s32 192, 192
          %253 = vsyncadd %s247, %s252
          %s254 = smul.addr %s20, 3
          %s255 = smul.addr %s254, 64
          %s256 = scalar_lea.hbm %s0, %s255
          %s258 = sshll.u32 %s250, 4
          %s259 = int_to_ptr.vmem [resolvable:$true] %s258
          %261 = dma.hbm_to_vmem [thread:$0]  %s256, 192, %s259, %s247
        $region44: #{tpu_custom_call.1} parent=39 // pred_fallthru
          _
      $region40: #{tpu_custom_call.1} parent=5 // pred_fallthru
        _
      %p262 = scmp.le.s32.totalorder 1, %s20
      %p263 = scmp.lt.s32.totalorder %s20, 3
      %p264 = pnand %p262, %p263
      %p265 = pneg %p264
      // Predicated region
      $region45: #{tpu_custom_call.1} parent=5 // pred_check
        _
      $region46: #{tpu_custom_call.1} parent=5 // pred_check_branch
        %267 = sbr.rel (%p264) target = $region48
      $region47: #{tpu_custom_call.1} parent=5 // pred_region
        %s268 = ssub.s32 %s20, 1
        %s269 = sand.u32 %s33, 1
        %s270 = scalar_lea.sflag [#allocation6], %s269
        %s271 = sand.u32 %s33, 1
        %s272 = smul.addr %s271, 12
        %s273 = scalar_lea.vmem [#allocation5], %s272
        // Predicated region
        $region49: #{tpu_custom_call.1} parent=47 // pred_check
          %p274 = pneg %p46
        $region50: #{tpu_custom_call.1} parent=47 // pred_check_branch
          %276 = sbr.rel (%p274) target = $region52
        $region51: #{tpu_custom_call.1} parent=47 // pred_region
          %277 = dma.done %s270, 192
        $region52: #{tpu_custom_call.1} parent=47 // pred_fallthru
          _
        // Predicated region
        $region53: #{tpu_custom_call.1} parent=47 // pred_check
          %p278 = pneg %p67
        $region54: #{tpu_custom_call.1} parent=47 // pred_check_branch
          %280 = sbr.rel (%p278) target = $region56
        $region55: #{tpu_custom_call.1} parent=47 // pred_region
          %281 = dma.done [#allocation9], 48
        $region56: #{tpu_custom_call.1} parent=47 // pred_fallthru
          _
        %s282 = sand.u32 %s33, 1
        %s283 = scalar_lea.sflag [#allocation6], %s282
        %s284 = sand.u32 %s33, 1
        %s285 = smul.addr %s284, 12
        %s286 = scalar_lea.vmem [#allocation5], %s285
        %p287 = pneg %p46
        %p288 = pneg %p43
        %p289 = pneg %p67
        %p290 = pneg %p64
        %p291 = pneg %p88
        %p292 = pneg %p85
        %p293 = pneg %p109
        %p294 = pneg %p106
        %p295 = pneg %p130
        %p296 = pneg %p127
        %p297 = pneg %p151
        %p298 = pneg %p148
        %p299 = pneg %p172
        %p300 = pneg %p169
        %p301 = pneg %p198
        %p302 = pneg %p195
        %s303 = sand.u32 %s185, 1
        %s304 = scalar_lea.sflag [#allocation7], %s303
        %s305 = sand.u32 %s185, 1
        %s306 = smul.addr %s305, 12
        %s307 = scalar_lea.vmem [#allocation10], %s306
        %308 = vst [vmem:[#allocation2] sm:$0xf] 0.0
        %309 = vst [vmem:[#allocation2 + $0x10] sm:$0xf] 0.0
        %v310 = vld [vmem:[%s273] sm:$0xff]
        %v311 = vld [vmem:[%s273 + $0x8] sm:$0xf]
        %312 = vst [vmem:[#allocation2 + $0x4] sm:$0xff] %v310
        %vm313 = vcmask 551936
        %314 = vst.msk [vmem:[#allocation2 + $0xc] sm:$0xf] %vm313, %v311
        %vm315 = vcmask 1044000
        %316 = vst.msk [vmem:[#allocation2 + $0xc] sm:$0xf] %vm315, 0.0
        %v317 = vld [vmem:[#allocation2 + $0x4] sm:$0xff]
        %v318 = vld [vmem:[#allocation2 + $0xc] sm:$0xf]
        %v319 = vld [vmem:[#allocation8] sm:$0x7]
        %v320 = vld [vmem:[#allocation2] sm:$0xff]
        %v321 = vld [vmem:[#allocation2 + $0x8] sm:$0xff]
        %v324 = vcombine.high %v320, %v320
        %v325 = vcombine.high %v321, %v321
        %326 = vrot.lane.b32.xlu0 %v320, 19
        %v327 = vpop.permute.xlu0 %326
        %328 = vrot.lane.b32.xlu0 %v324, 19
        %v329 = vpop.permute.xlu0 %328
        %330 = vrot.lane.b32.xlu0 %v321, 19
        %v331 = vpop.permute.xlu0 %330
        %332 = vrot.lane.b32.xlu0 %v325, 19
        %v333 = vpop.permute.xlu0 %332
        %vm334 = vcmask 154624
        %v335 = vsel %vm334, %v327, %v329
        %v336 = vsel %vm334, %v329, %v331
        %v337 = vsel %vm334, %v331, %v333
        %341 = vst [vmem:[#allocation3] sm:$0xf] %v335
        %342 = vst [vmem:[#allocation3 + $0x8] sm:$0xf] %v336
        %343 = vst [vmem:[#allocation3 + $0x10] sm:$0xf] %v337
        %v344 = vld [vmem:[#allocation2] sm:$0xff]
        %v345 = vld [vmem:[#allocation2 + $0x8] sm:$0xff]
        %v348 = vcombine.low %v344, %v344
        %v349 = vcombine.low %v345, %v345
        %350 = vrot.lane.b32.xlu0 %v348, 18
        %v351 = vpop.permute.xlu0 %350
        %352 = vrot.lane.b32.xlu0 %v344, 18
        %v353 = vpop.permute.xlu0 %352
        %354 = vrot.lane.b32.xlu0 %v349, 18
        %v355 = vpop.permute.xlu0 %354
        %356 = vrot.lane.b32.xlu0 %v345, 18
        %v357 = vpop.permute.xlu0 %356
        %vm358 = vcmask 146432
        %v359 = vsel %vm358, %v351, %v353
        %v360 = vsel %vm358, %v353, %v355
        %v361 = vsel %vm358, %v355, %v357
        %365 = vst [vmem:[#allocation3] sm:$0xf0] %v359
        %366 = vst [vmem:[#allocation3 + $0x8] sm:$0xf0] %v360
        %367 = vst [vmem:[#allocation3 + $0x10] sm:$0xf0] %v361
        %v368 = vld [vmem:[#allocation2] sm:$0xff]
        %v369 = vld [vmem:[#allocation2 + $0x8] sm:$0xff]
        %v372 = vcombine.high %v368, %v368
        %v373 = vcombine.high %v369, %v369
        %374 = vrot.lane.b32.xlu0 %v368, 17
        %v375 = vpop.permute.xlu0 %374
        %376 = vrot.lane.b32.xlu0 %v372, 17
        %v377 = vpop.permute.xlu0 %376
        %378 = vrot.lane.b32.xlu0 %v369, 17
        %v379 = vpop.permute.xlu0 %378
        %380 = vrot.lane.b32.xlu0 %v373, 17
        %v381 = vpop.permute.xlu0 %380
        %vm382 = vcmask 138240
        %v383 = vsel %vm382, %v375, %v377
        %v384 = vsel %vm382, %v377, %v379
        %v385 = vsel %vm382, %v379, %v381
        %389 = vst [vmem:[#allocation3 + $0x18] sm:$0xf] %v383
        %390 = vst [vmem:[#allocation3 + $0x20] sm:$0xf] %v384
        %391 = vst [vmem:[#allocation3 + $0x28] sm:$0xf] %v385
        %v392 = vld [vmem:[%s2] sm:$0xf]
        %v393 = vld [vmem:[#allocation3] sm:$0xff]
        %v394 = vld [vmem:[#allocation3 + $0x8] sm:$0xff]
        %v395 = vld [vmem:[#allocation3 + $0x10] sm:$0xff]
        %v396 = vld [vmem:[#allocation3 + $0x18] sm:$0xf]
        %v397 = vld [vmem:[#allocation3 + $0x20] sm:$0xf]
        %v398 = vld [vmem:[#allocation3 + $0x28] sm:$0xf]
        %v399 = vld [vmem:[#allocation2] sm:$0xff]
        %v400 = vld [vmem:[#allocation2 + $0x8] sm:$0xff]
        %v403 = vcombine.high %v399, %v399
        %v404 = vcombine.high %v400, %v400
        %405 = vrot.lane.b32.xlu0 %v399, 1
        %v406 = vpop.permute.xlu0 %405
        %407 = vrot.lane.b32.xlu0 %v403, 1
        %v408 = vpop.permute.xlu0 %407
        %409 = vrot.lane.b32.xlu0 %v400, 1
        %v410 = vpop.permute.xlu0 %409
        %411 = vrot.lane.b32.xlu0 %v404, 1
        %v412 = vpop.permute.xlu0 %411
        %vm413 = vcmask 7168
        %v414 = vsel %vm413, %v406, %v408
        %v415 = vsel %vm413, %v408, %v410
        %v416 = vsel %vm413, %v410, %v412
        %420 = vst [vmem:[#allocation4] sm:$0xf] %v414
        %421 = vst [vmem:[#allocation4 + $0x8] sm:$0xf] %v415
        %422 = vst [vmem:[#allocation4 + $0x10] sm:$0xf] %v416
        %v423 = vld [vmem:[#allocation2 + $0x4] sm:$0xff]
        %v424 = vld [vmem:[#allocation2 + $0xc] sm:$0xf]
        %v427 = vcombine.low %v423, %v423
        %v428 = vcombine.low %v424, %v424
        %431 = vst [vmem:[#allocation4] sm:$0xf0] %v427
        %432 = vst [vmem:[#allocation4 + $0x8] sm:$0xf0] %v423
        %433 = vst [vmem:[#allocation4 + $0x10] sm:$0xf0] %v428
        %v434 = vld [vmem:[#allocation2 + $0x4] sm:$0xff]
        %v435 = vld [vmem:[#allocation2 + $0xc] sm:$0xff]
        %v438 = vcombine.high %v434, %v434
        %v439 = vcombine.high %v435, %v435
        %440 = vrot.lane.b32.xlu0 %v434, 127
        %v441 = vpop.permute.xlu0 %440
        %442 = vrot.lane.b32.xlu0 %v438, 127
        %v443 = vpop.permute.xlu0 %442
        %444 = vrot.lane.b32.xlu0 %v435, 127
        %v445 = vpop.permute.xlu0 %444
        %446 = vrot.lane.b32.xlu0 %v439, 127
        %v447 = vpop.permute.xlu0 %446
        %vm448 = vcmask 1039360
        %v449 = vsel %vm448, %v441, %v443
        %v450 = vsel %vm448, %v443, %v445
        %v451 = vsel %vm448, %v445, %v447
        %455 = vst [vmem:[#allocation4 + $0x18] sm:$0xf] %v449
        %456 = vst [vmem:[#allocation4 + $0x20] sm:$0xf] %v450
        %457 = vst [vmem:[#allocation4 + $0x28] sm:$0xf] %v451
        %v458 = vld [vmem:[%s2] sm:$0xf]
        %v459 = vld [vmem:[#allocation4] sm:$0xff]
        %v460 = vld [vmem:[#allocation4 + $0x8] sm:$0xff]
        %v461 = vld [vmem:[#allocation4 + $0x10] sm:$0xff]
        %v462 = vld [vmem:[#allocation4 + $0x18] sm:$0xf]
        %v463 = vld [vmem:[#allocation4 + $0x20] sm:$0xf]
        %v464 = vld [vmem:[#allocation4 + $0x28] sm:$0xf]
        %466 = vrot.lane.b32.xlu0 %v458, 116
        %v467 = vpop.permute.xlu0 %466
        %vm468 = vcmask 97280
        %v469 = vsel %vm468, %v467, 0
        %vm471 = vcmask 1043456
        %v473 = vsel %vm471, %v462, 0
        %v476 = vsel %vm471, %v463, 0
        %v479 = vsel %vm471, %v464, 0
        %481 = vmatprep.subr.mxu0 %v460
        %482 = vmatpush1.msra.mxu0 %v459
        %483 = vmatprep.subr.mxu0 %v476
        %484 = vmatpush1.msra.mxu0 %v473
        %485 = vmatprep.subr.mxu0 0.0
        %486 = vmatpush1.msra.mxu0 0.0
        %487 = vmatprep.subr.mxu0 0.0
        %488 = vmatpush1.msra.mxu0 0.0
        %489 = vmatprep.subr.mxu0 0.0
        %490 = vmatpush1.msra.mxu0 0.0
        %491 = vmatprep.subr.mxu0 0.0
        %492 = vmatpush1.msra.mxu0 0.0
        %493 = vmatprep.subr.mxu0 0.0
        %494 = vmatpush1.msra.mxu0 0.0
        %495 = vmatprep.subr.mxu0 0.0
        %496 = vmatpush1.msra.mxu0 0.0
        %497 = vmatprep.subr.mxu0 0.0
        %498 = vmatpush1.msra.mxu0 0.0
        %499 = vmatprep.subr.mxu0 0.0
        %500 = vmatpush1.msra.mxu0 0.0
        %501 = vmatprep.subr.mxu0 0.0
        %502 = vmatpush1.msra.mxu0 0.0
        %503 = vmatprep.subr.mxu0 0.0
        %504 = vmatpush1.msra.mxu0 0.0
        %505 = vmatprep.subr.mxu0 0.0
        %506 = vmatpush1.msra.mxu0 0.0
        %507 = vmatprep.subr.mxu0 0.0
        %508 = vmatpush1.msra.mxu0 0.0
        %509 = vmatprep.subr.mxu0 0.0
        %510 = vmatpush1.msra.mxu0 0.0
        %511 = vmatprep.subr.mxu0 0.0
        %512 = vmatpush1.msra.mxu0 0.0
        %513 = vmatprep.subr.mxu0 0.0
        %514 = vmatpush1.msra.mxu0 0.0
        %515 = vmatprep.subr.mxu0 0.0
        %516 = vmatpush1.msra.mxu0 0.0
        %517 = vmatprep.subr.mxu0 0.0
        %518 = vmatpush1.msra.mxu0 0.0
        %519 = vmatprep.subr.mxu0 0.0
        %520 = vmatpush1.msra.mxu0 0.0
        %521 = vmatprep.subr.mxu0 0.0
        %522 = vmatpush1.msra.mxu0 0.0
        %523 = vmatprep.subr.mxu0 0.0
        %524 = vmatpush1.msra.mxu0 0.0
        %525 = vmatprep.subr.mxu0 0.0
        %526 = vmatpush1.msra.mxu0 0.0
        %527 = vmatprep.subr.mxu0 0.0
        %528 = vmatpush1.msra.mxu0 0.0
        %529 = vmatprep.subr.mxu0 0.0
        %530 = vmatpush1.msra.mxu0 0.0
        %531 = vmatprep.subr.mxu0 0.0
        %532 = vmatpush1.msra.mxu0 0.0
        %533 = vmatprep.subr.mxu0 0.0
        %534 = vmatpush1.msra.mxu0 0.0
        %535 = vmatprep.subr.mxu0 0.0
        %536 = vmatpush1.msra.mxu0 0.0
        %537 = vmatprep.subr.mxu0 0.0
        %538 = vmatpush1.msra.mxu0 0.0
        %539 = vmatprep.subr.mxu0 0.0
        %540 = vmatpush1.msra.mxu0 0.0
        %541 = vmatprep.subr.mxu0 0.0
        %542 = vmatpush1.msra.mxu0 0.0
        %543 = vmatprep.subr.mxu0 0.0
        %544 = vmatpush1.msra.mxu0 0.0
        %545 = vmatprep.mubr.f32.mxu0 0.0
        %546 = vmatmul.mubr.f32.gmra.mrb[0].mxu0 %v469
        %v547 = vpop.f32.mrb[0].mxu0
        %v548 = vadd.f32 0.0, %v547
        %v549 = vpop.f32.mrb[0].mxu0
        %v550 = vadd.f32 0.0, %v549
        %551 = vdwg.mxu0
        %552 = vmatprep.subr.mxu0 0.0
        %553 = vmatpush1.msra.mxu0 %v461
        %554 = vmatprep.subr.mxu0 0.0
        %555 = vmatpush1.msra.mxu0 %v479
        %556 = vmatprep.subr.mxu0 0.0
        %557 = vmatpush1.msra.mxu0 0.0
        %558 = vmatprep.subr.mxu0 0.0
        %559 = vmatpush1.msra.mxu0 0.0
        %560 = vmatprep.subr.mxu0 0.0
        %561 = vmatpush1.msra.mxu0 0.0
        %562 = vmatprep.subr.mxu0 0.0
        %563 = vmatpush1.msra.mxu0 0.0
        %564 = vmatprep.subr.mxu0 0.0
        %565 = vmatpush1.msra.mxu0 0.0
        %566 = vmatprep.subr.mxu0 0.0
        %567 = vmatpush1.msra.mxu0 0.0
        %568 = vmatprep.subr.mxu0 0.0
        %569 = vmatpush1.msra.mxu0 0.0
        %570 = vmatprep.subr.mxu0 0.0
        %571 = vmatpush1.msra.mxu0 0.0
        %572 = vmatprep.subr.mxu0 0.0
        %573 = vmatpush1.msra.mxu0 0.0
        %574 = vmatprep.subr.mxu0 0.0
        %575 = vmatpush1.msra.mxu0 0.0
        %576 = vmatprep.subr.mxu0 0.0
        %577 = vmatpush1.msra.mxu0 0.0
        %578 = vmatprep.subr.mxu0 0.0
        %579 = vmatpush1.msra.mxu0 0.0
        %580 = vmatprep.subr.mxu0 0.0
        %581 = vmatpush1.msra.mxu0 0.0
        %582 = vmatprep.subr.mxu0 0.0
        %583 = vmatpush1.msra.mxu0 0.0
        %584 = vmatprep.subr.mxu0 0.0
        %585 = vmatpush1.msra.mxu0 0.0
        %586 = vmatprep.subr.mxu0 0.0
        %587 = vmatpush1.msra.mxu0 0.0
        %588 = vmatprep.subr.mxu0 0.0
        %589 = vmatpush1.msra.mxu0 0.0
        %590 = vmatprep.subr.mxu0 0.0
        %591 = vmatpush1.msra.mxu0 0.0
        %592 = vmatprep.subr.mxu0 0.0
        %593 = vmatpush1.msra.mxu0 0.0
        %594 = vmatprep.subr.mxu0 0.0
        %595 = vmatpush1.msra.mxu0 0.0
        %596 = vmatprep.subr.mxu0 0.0
        %597 = vmatpush1.msra.mxu0 0.0
        %598 = vmatprep.subr.mxu0 0.0
        %599 = vmatpush1.msra.mxu0 0.0
        %600 = vmatprep.subr.mxu0 0.0
        %601 = vmatpush1.msra.mxu0 0.0
        %602 = vmatprep.subr.mxu0 0.0
        %603 = vmatpush1.msra.mxu0 0.0
        %604 = vmatprep.subr.mxu0 0.0
        %605 = vmatpush1.msra.mxu0 0.0
        %606 = vmatprep.subr.mxu0 0.0
        %607 = vmatpush1.msra.mxu0 0.0
        %608 = vmatprep.subr.mxu0 0.0
        %609 = vmatpush1.msra.mxu0 0.0
        %610 = vmatprep.subr.mxu0 0.0
        %611 = vmatpush1.msra.mxu0 0.0
        %612 = vmatprep.subr.mxu0 0.0
        %613 = vmatpush1.msra.mxu0 0.0
        %614 = vmatprep.subr.mxu0 0.0
        %615 = vmatpush1.msra.mxu0 0.0
        %616 = vmatprep.mubr.f32.mxu0 0.0
        %617 = vmatmul.mubr.f32.gmra.mrb[0].mxu0 %v469
        %v618 = vpop.f32.mrb[0].mxu0
        %v619 = vadd.f32 0.0, %v618
        %v620 = vpop.f32.mrb[0].mxu0
        %621 = vdwg.mxu0
        %v623 = vsel %vm468, %v392, 0
        %v626 = vsel %vm471, %v396, 0
        %v629 = vsel %vm471, %v397, 0
        %v632 = vsel %vm471, %v398, 0
        %634 = vmatprep.subr.mxu0 %v394
        %635 = vmatpush1.msra.mxu0 %v393
        %636 = vmatprep.subr.mxu0 %v629
        %637 = vmatpush1.msra.mxu0 %v626
        %638 = vmatprep.subr.mxu0 0.0
        %639 = vmatpush1.msra.mxu0 0.0
        %640 = vmatprep.subr.mxu0 0.0
        %641 = vmatpush1.msra.mxu0 0.0
        %642 = vmatprep.subr.mxu0 0.0
        %643 = vmatpush1.msra.mxu0 0.0
        %644 = vmatprep.subr.mxu0 0.0
        %645 = vmatpush1.msra.mxu0 0.0
        %646 = vmatprep.subr.mxu0 0.0
        %647 = vmatpush1.msra.mxu0 0.0
        %648 = vmatprep.subr.mxu0 0.0
        %649 = vmatpush1.msra.mxu0 0.0
        %650 = vmatprep.subr.mxu0 0.0
        %651 = vmatpush1.msra.mxu0 0.0
        %652 = vmatprep.subr.mxu0 0.0
        %653 = vmatpush1.msra.mxu0 0.0
        %654 = vmatprep.subr.mxu0 0.0
        %655 = vmatpush1.msra.mxu0 0.0
        %656 = vmatprep.subr.mxu0 0.0
        %657 = vmatpush1.msra.mxu0 0.0
        %658 = vmatprep.subr.mxu0 0.0
        %659 = vmatpush1.msra.mxu0 0.0
        %660 = vmatprep.subr.mxu0 0.0
        %661 = vmatpush1.msra.mxu0 0.0
        %662 = vmatprep.subr.mxu0 0.0
        %663 = vmatpush1.msra.mxu0 0.0
        %664 = vmatprep.subr.mxu0 0.0
        %665 = vmatpush1.msra.mxu0 0.0
        %666 = vmatprep.subr.mxu0 0.0
        %667 = vmatpush1.msra.mxu0 0.0
        %668 = vmatprep.subr.mxu0 0.0
        %669 = vmatpush1.msra.mxu0 0.0
        %670 = vmatprep.subr.mxu0 0.0
        %671 = vmatpush1.msra.mxu0 0.0
        %672 = vmatprep.subr.mxu0 0.0
        %673 = vmatpush1.msra.mxu0 0.0
        %674 = vmatprep.subr.mxu0 0.0
        %675 = vmatpush1.msra.mxu0 0.0
        %676 = vmatprep.subr.mxu0 0.0
        %677 = vmatpush1.msra.mxu0 0.0
        %678 = vmatprep.subr.mxu0 0.0
        %679 = vmatpush1.msra.mxu0 0.0
        %680 = vmatprep.subr.mxu0 0.0
        %681 = vmatpush1.msra.mxu0 0.0
        %682 = vmatprep.subr.mxu0 0.0
        %683 = vmatpush1.msra.mxu0 0.0
        %684 = vmatprep.subr.mxu0 0.0
        %685 = vmatpush1.msra.mxu0 0.0
        %686 = vmatprep.subr.mxu0 0.0
        %687 = vmatpush1.msra.mxu0 0.0
        %688 = vmatprep.subr.mxu0 0.0
        %689 = vmatpush1.msra.mxu0 0.0
        %690 = vmatprep.subr.mxu0 0.0
        %691 = vmatpush1.msra.mxu0 0.0
        %692 = vmatprep.subr.mxu0 0.0
        %693 = vmatpush1.msra.mxu0 0.0
        %694 = vmatprep.subr.mxu0 0.0
        %695 = vmatpush1.msra.mxu0 0.0
        %696 = vmatprep.subr.mxu0 0.0
        %697 = vmatpush1.msra.mxu0 0.0
        %698 = vmatprep.mubr.f32.mxu0 0.0
        %699 = vmatmul.mubr.f32.gmra.mrb[0].mxu0 %v623
        %v700 = vpop.f32.mrb[0].mxu0
        %v701 = vadd.f32 %v548, %v700
        %v702 = vpop.f32.mrb[0].mxu0
        %v703 = vadd.f32 %v550, %v702
        %704 = vdwg.mxu0
        %705 = vmatprep.subr.mxu0 0.0
        %706 = vmatpush1.msra.mxu0 %v395
        %707 = vmatprep.subr.mxu0 0.0
        %708 = vmatpush1.msra.mxu0 %v632
        %709 = vmatprep.subr.mxu0 0.0
        %710 = vmatpush1.msra.mxu0 0.0
        %711 = vmatprep.subr.mxu0 0.0
        %712 = vmatpush1.msra.mxu0 0.0
        %713 = vmatprep.subr.mxu0 0.0
        %714 = vmatpush1.msra.mxu0 0.0
        %715 = vmatprep.subr.mxu0 0.0
        %716 = vmatpush1.msra.mxu0 0.0
        %717 = vmatprep.subr.mxu0 0.0
        %718 = vmatpush1.msra.mxu0 0.0
        %719 = vmatprep.subr.mxu0 0.0
        %720 = vmatpush1.msra.mxu0 0.0
        %721 = vmatprep.subr.mxu0 0.0
        %722 = vmatpush1.msra.mxu0 0.0
        %723 = vmatprep.subr.mxu0 0.0
        %724 = vmatpush1.msra.mxu0 0.0
        %725 = vmatprep.subr.mxu0 0.0
        %726 = vmatpush1.msra.mxu0 0.0
        %727 = vmatprep.subr.mxu0 0.0
        %728 = vmatpush1.msra.mxu0 0.0
        %729 = vmatprep.subr.mxu0 0.0
        %730 = vmatpush1.msra.mxu0 0.0
        %731 = vmatprep.subr.mxu0 0.0
        %732 = vmatpush1.msra.mxu0 0.0
        %733 = vmatprep.subr.mxu0 0.0
        %734 = vmatpush1.msra.mxu0 0.0
        %735 = vmatprep.subr.mxu0 0.0
        %736 = vmatpush1.msra.mxu0 0.0
        %737 = vmatprep.subr.mxu0 0.0
        %738 = vmatpush1.msra.mxu0 0.0
        %739 = vmatprep.subr.mxu0 0.0
        %740 = vmatpush1.msra.mxu0 0.0
        %741 = vmatprep.subr.mxu0 0.0
        %742 = vmatpush1.msra.mxu0 0.0
        %743 = vmatprep.subr.mxu0 0.0
        %744 = vmatpush1.msra.mxu0 0.0
        %745 = vmatprep.subr.mxu0 0.0
        %746 = vmatpush1.msra.mxu0 0.0
        %747 = vmatprep.subr.mxu0 0.0
        %748 = vmatpush1.msra.mxu0 0.0
        %749 = vmatprep.subr.mxu0 0.0
        %750 = vmatpush1.msra.mxu0 0.0
        %751 = vmatprep.subr.mxu0 0.0
        %752 = vmatpush1.msra.mxu0 0.0
        %753 = vmatprep.subr.mxu0 0.0
        %754 = vmatpush1.msra.mxu0 0.0
        %755 = vmatprep.subr.mxu0 0.0
        %756 = vmatpush1.msra.mxu0 0.0
        %757 = vmatprep.subr.mxu0 0.0
        %758 = vmatpush1.msra.mxu0 0.0
        %759 = vmatprep.subr.mxu0 0.0
        %760 = vmatpush1.msra.mxu0 0.0
        %761 = vmatprep.subr.mxu0 0.0
        %762 = vmatpush1.msra.mxu0 0.0
        %763 = vmatprep.subr.mxu0 0.0
        %764 = vmatpush1.msra.mxu0 0.0
        %765 = vmatprep.subr.mxu0 0.0
        %766 = vmatpush1.msra.mxu0 0.0
        %767 = vmatprep.subr.mxu0 0.0
        %768 = vmatpush1.msra.mxu0 0.0
        %769 = vmatprep.mubr.f32.mxu0 0.0
        %770 = vmatmul.mubr.f32.gmra.mrb[0].mxu0 %v623
        %v771 = vpop.f32.mrb[0].mxu0
        %v772 = vadd.f32 %v619, %v771
        %v773 = vpop.f32.mrb[0].mxu0
        %774 = vdwg.mxu0
        %v775 = vld [vmem:[#allocation2 + $0x4] sm:$0xff]
        %v776 = vld [vmem:[#allocation2 + $0xc] sm:$0xff]
        %v779 = vcombine.high %v775, %v775
        %v780 = vcombine.high %v776, %v776
        %781 = vrot.lane.b32.xlu0 %v775, 111
        %v782 = vpop.permute.xlu0 %781
        %783 = vrot.lane.b32.xlu0 %v779, 111
        %v784 = vpop.permute.xlu0 %783
        %785 = vrot.lane.b32.xlu0 %v776, 111
        %v786 = vpop.permute.xlu0 %785
        %787 = vrot.lane.b32.xlu0 %v780, 111
        %v788 = vpop.permute.xlu0 %787
        %vm789 = vcmask 908288
        %v790 = vsel %vm789, %v782, %v784
        %v791 = vsel %vm789, %v784, %v786
        %v792 = vsel %vm789, %v786, %v788
        %796 = vst [vmem:[#allocation3] sm:$0xf] %v790
        %797 = vst [vmem:[#allocation3 + $0x8] sm:$0xf] %v791
        %798 = vst [vmem:[#allocation3 + $0x10] sm:$0xf] %v792
        %v799 = vld [vmem:[#allocation2 + $0x4] sm:$0xff]
        %v800 = vld [vmem:[#allocation2 + $0xc] sm:$0xff]
        %v803 = vcombine.low %v799, %v799
        %v804 = vcombine.low %v800, %v800
        %805 = vrot.lane.b32.xlu0 %v803, 110
        %v806 = vpop.permute.xlu0 %805
        %807 = vrot.lane.b32.xlu0 %v799, 110
        %v808 = vpop.permute.xlu0 %807
        %809 = vrot.lane.b32.xlu0 %v804, 110
        %v810 = vpop.permute.xlu0 %809
        %811 = vrot.lane.b32.xlu0 %v800, 110
        %v812 = vpop.permute.xlu0 %811
        %vm813 = vcmask 900096
        %v814 = vsel %vm813, %v806, %v808
        %v815 = vsel %vm813, %v808, %v810
        %v816 = vsel %vm813, %v810, %v812
        %820 = vst [vmem:[#allocation3] sm:$0xf0] %v814
        %821 = vst [vmem:[#allocation3 + $0x8] sm:$0xf0] %v815
        %822 = vst [vmem:[#allocation3 + $0x10] sm:$0xf0] %v816
        %v823 = vld [vmem:[#allocation2 + $0x4] sm:$0xff]
        %v824 = vld [vmem:[#allocation2 + $0xc] sm:$0xff]
        %v827 = vcombine.high %v823, %v823
        %v828 = vcombine.high %v824, %v824
        %829 = vrot.lane.b32.xlu0 %v823, 109
        %v830 = vpop.permute.xlu0 %829
        %831 = vrot.lane.b32.xlu0 %v827, 109
        %v832 = vpop.permute.xlu0 %831
        %833 = vrot.lane.b32.xlu0 %v824, 109
        %v834 = vpop.permute.xlu0 %833
        %835 = vrot.lane.b32.xlu0 %v828, 109
        %v836 = vpop.permute.xlu0 %835
        %vm837 = vcmask 891904
        %v838 = vsel %vm837, %v830, %v832
        %v839 = vsel %vm837, %v832, %v834
        %v840 = vsel %vm837, %v834, %v836
        %844 = vst [vmem:[#allocation3 + $0x18] sm:$0xf] %v838
        %845 = vst [vmem:[#allocation3 + $0x20] sm:$0xf] %v839
        %846 = vst [vmem:[#allocation3 + $0x28] sm:$0xf] %v840
        %v847 = vld [vmem:[%s2] sm:$0xf]
        %v848 = vld [vmem:[#allocation3] sm:$0xff]
        %v849 = vld [vmem:[#allocation3 + $0x8] sm:$0xff]
        %v850 = vld [vmem:[#allocation3 + $0x10] sm:$0xff]
        %v851 = vld [vmem:[#allocation3 + $0x18] sm:$0xf]
        %v852 = vld [vmem:[#allocation3 + $0x20] sm:$0xf]
        %v853 = vld [vmem:[#allocation3 + $0x28] sm:$0xf]
        %855 = vrot.lane.b32.xlu0 %v847, 104
        %v856 = vpop.permute.xlu0 %855
        %v857 = vsel %vm468, %v856, 0
        %v860 = vsel %vm471, %v851, 0
        %v863 = vsel %vm471, %v852, 0
        %v866 = vsel %vm471, %v853, 0
        %868 = vmatprep.subr.mxu0 %v849
        %869 = vmatpush1.msra.mxu0 %v848
        %870 = vmatprep.subr.mxu0 %v863
        %871 = vmatpush1.msra.mxu0 %v860
        %872 = vmatprep.subr.mxu0 0.0
        %873 = vmatpush1.msra.mxu0 0.0
        %874 = vmatprep.subr.mxu0 0.0
        %875 = vmatpush1.msra.mxu0 0.0
        %876 = vmatprep.subr.mxu0 0.0
        %877 = vmatpush1.msra.mxu0 0.0
        %878 = vmatprep.subr.mxu0 0.0
        %879 = vmatpush1.msra.mxu0 0.0
        %880 = vmatprep.subr.mxu0 0.0
        %881 = vmatpush1.msra.mxu0 0.0
        %882 = vmatprep.subr.mxu0 0.0
        %883 = vmatpush1.msra.mxu0 0.0
        %884 = vmatprep.subr.mxu0 0.0
        %885 = vmatpush1.msra.mxu0 0.0
        %886 = vmatprep.subr.mxu0 0.0
        %887 = vmatpush1.msra.mxu0 0.0
        %888 = vmatprep.subr.mxu0 0.0
        %889 = vmatpush1.msra.mxu0 0.0
        %890 = vmatprep.subr.mxu0 0.0
        %891 = vmatpush1.msra.mxu0 0.0
        %892 = vmatprep.subr.mxu0 0.0
        %893 = vmatpush1.msra.mxu0 0.0
        %894 = vmatprep.subr.mxu0 0.0
        %895 = vmatpush1.msra.mxu0 0.0
        %896 = vmatprep.subr.mxu0 0.0
        %897 = vmatpush1.msra.mxu0 0.0
        %898 = vmatprep.subr.mxu0 0.0
        %899 = vmatpush1.msra.mxu0 0.0
        %900 = vmatprep.subr.mxu0 0.0
        %901 = vmatpush1.msra.mxu0 0.0
        %902 = vmatprep.subr.mxu0 0.0
        %903 = vmatpush1.msra.mxu0 0.0
        %904 = vmatprep.subr.mxu0 0.0
        %905 = vmatpush1.msra.mxu0 0.0
        %906 = vmatprep.subr.mxu0 0.0
        %907 = vmatpush1.msra.mxu0 0.0
        %908 = vmatprep.subr.mxu0 0.0
        %909 = vmatpush1.msra.mxu0 0.0
        %910 = vmatprep.subr.mxu0 0.0
        %911 = vmatpush1.msra.mxu0 0.0
        %912 = vmatprep.subr.mxu0 0.0
        %913 = vmatpush1.msra.mxu0 0.0
        %914 = vmatprep.subr.mxu0 0.0
        %915 = vmatpush1.msra.mxu0 0.0
        %916 = vmatprep.subr.mxu0 0.0
        %917 = vmatpush1.msra.mxu0 0.0
        %918 = vmatprep.subr.mxu0 0.0
        %919 = vmatpush1.msra.mxu0 0.0
        %920 = vmatprep.subr.mxu0 0.0
        %921 = vmatpush1.msra.mxu0 0.0
        %922 = vmatprep.subr.mxu0 0.0
        %923 = vmatpush1.msra.mxu0 0.0
        %924 = vmatprep.subr.mxu0 0.0
        %925 = vmatpush1.msra.mxu0 0.0
        %926 = vmatprep.subr.mxu0 0.0
        %927 = vmatpush1.msra.mxu0 0.0
        %928 = vmatprep.subr.mxu0 0.0
        %929 = vmatpush1.msra.mxu0 0.0
        %930 = vmatprep.subr.mxu0 0.0
        %931 = vmatpush1.msra.mxu0 0.0
        %932 = vmatprep.mubr.f32.mxu0 0.0
        %933 = vmatmul.mubr.f32.gmra.mrb[0].mxu0 %v857
        %v934 = vpop.f32.mrb[0].mxu0
        %v935 = vadd.f32 0.0, %v934
        %v936 = vpop.f32.mrb[0].mxu0
        %v937 = vadd.f32 0.0, %v936
        %938 = vdwg.mxu0
        %939 = vmatprep.subr.mxu0 0.0
        %940 = vmatpush1.msra.mxu0 %v850
        %941 = vmatprep.subr.mxu0 0.0
        %942 = vmatpush1.msra.mxu0 %v866
        %943 = vmatprep.subr.mxu0 0.0
        %944 = vmatpush1.msra.mxu0 0.0
        %945 = vmatprep.subr.mxu0 0.0
        %946 = vmatpush1.msra.mxu0 0.0
        %947 = vmatprep.subr.mxu0 0.0
        %948 = vmatpush1.msra.mxu0 0.0
        %949 = vmatprep.subr.mxu0 0.0
        %950 = vmatpush1.msra.mxu0 0.0
        %951 = vmatprep.subr.mxu0 0.0
        %952 = vmatpush1.msra.mxu0 0.0
        %953 = vmatprep.subr.mxu0 0.0
        %954 = vmatpush1.msra.mxu0 0.0
        %955 = vmatprep.subr.mxu0 0.0
        %956 = vmatpush1.msra.mxu0 0.0
        %957 = vmatprep.subr.mxu0 0.0
        %958 = vmatpush1.msra.mxu0 0.0
        %959 = vmatprep.subr.mxu0 0.0
        %960 = vmatpush1.msra.mxu0 0.0
        %961 = vmatprep.subr.mxu0 0.0
        %962 = vmatpush1.msra.mxu0 0.0
        %963 = vmatprep.subr.mxu0 0.0
        %964 = vmatpush1.msra.mxu0 0.0
        %965 = vmatprep.subr.mxu0 0.0
        %966 = vmatpush1.msra.mxu0 0.0
        %967 = vmatprep.subr.mxu0 0.0
        %968 = vmatpush1.msra.mxu0 0.0
        %969 = vmatprep.subr.mxu0 0.0
        %970 = vmatpush1.msra.mxu0 0.0
        %971 = vmatprep.subr.mxu0 0.0
        %972 = vmatpush1.msra.mxu0 0.0
        %973 = vmatprep.subr.mxu0 0.0
        %974 = vmatpush1.msra.mxu0 0.0
        %975 = vmatprep.subr.mxu0 0.0
        %976 = vmatpush1.msra.mxu0 0.0
        %977 = vmatprep.subr.mxu0 0.0
        %978 = vmatpush1.msra.mxu0 0.0
        %979 = vmatprep.subr.mxu0 0.0
        %980 = vmatpush1.msra.mxu0 0.0
        %981 = vmatprep.subr.mxu0 0.0
        %982 = vmatpush1.msra.mxu0 0.0
        %983 = vmatprep.subr.mxu0 0.0
        %984 = vmatpush1.msra.mxu0 0.0
        %985 = vmatprep.subr.mxu0 0.0
        %986 = vmatpush1.msra.mxu0 0.0
        %987 = vmatprep.subr.mxu0 0.0
        %988 = vmatpush1.msra.mxu0 0.0
        %989 = vmatprep.subr.mxu0 0.0
        %990 = vmatpush1.msra.mxu0 0.0
        %991 = vmatprep.subr.mxu0 0.0
        %992 = vmatpush1.msra.mxu0 0.0
        %993 = vmatprep.subr.mxu0 0.0
        %994 = vmatpush1.msra.mxu0 0.0
        %995 = vmatprep.subr.mxu0 0.0
        %996 = vmatpush1.msra.mxu0 0.0
        %997 = vmatprep.subr.mxu0 0.0
        %998 = vmatpush1.msra.mxu0 0.0
        %999 = vmatprep.subr.mxu0 0.0
        %1000 = vmatpush1.msra.mxu0 0.0
        %1001 = vmatprep.subr.mxu0 0.0
        %1002 = vmatpush1.msra.mxu0 0.0
        %1003 = vmatprep.mubr.f32.mxu0 0.0
        %1004 = vmatmul.mubr.f32.gmra.mrb[0].mxu0 %v857
        %v1005 = vpop.f32.mrb[0].mxu0
        %v1006 = vadd.f32 0.0, %v1005
        %v1007 = vpop.f32.mrb[0].mxu0
        %1008 = vdwg.mxu0
        %v1009 = vadd.f32 %v701, %v935
        %v1010 = vadd.f32 %v703, %v937
        %v1011 = vadd.f32 %v772, %v1006
        %v1012 = vld [vmem:[%s3] sm:$0xf]
        %1014 = vset.pattern.permute.xlu0 0
        %1015 = vperm.xlu0 %1014, %v1012
        %v1016 = vpop.permute.xlu0 %1015
        %v1018 = vadd.f32 %v1009, %v1016
        %v1019 = vadd.f32 %v1010, %v1016
        %v1020 = vadd.f32 %v1011, %v1016
        %v1021 = vmax.f32 %v1018, 0.0
        %v1022 = vmax.f32 %v1019, 0.0
        %v1023 = vmax.f32 %v1020, 0.0
        %v1025 = vlaneseq
        %v1026 = vshrl.u32 %v1025, 7
        %v1027 = vsub.s32 0, %v1026
        %v1028 = vrot.slane %v319, %v1027
        %v1029 = vlaneseq
        %v1030 = vshrl.u32 %v1029, 7
        %v1031 = vsub.s32 1, %v1030
        %v1032 = vrot.slane %v319, %v1031
        %v1033 = vlaneseq
        %v1034 = vshrl.u32 %v1033, 7
        %v1035 = vsub.s32 2, %v1034
        %v1036 = vrot.slane %v319, %v1035
        %v1040 = vmul.f32 %v1021, %v1028
        %v1041 = vmul.f32 %v1022, %v1032
        %v1042 = vmul.f32 %v1023, %v1036
        %v1045 = vcombine.low %v1040, %v1041
        %1047 = vst [vmem:[#allocation2 + $0x4] sm:$0xff] %v1045
        %1048 = vst [vmem:[#allocation2 + $0xc] sm:$0xf] %v1042
        %v1049 = vld [vmem:[#allocation2] sm:$0xff]
        %v1050 = vld [vmem:[#allocation2 + $0x8] sm:$0xff]
        %v1053 = vcombine.high %v1049, %v1049
        %v1054 = vcombine.high %v1050, %v1050
        %1055 = vrot.lane.b32.xlu0 %v1049, 19
        %v1056 = vpop.permute.xlu0 %1055
        %1057 = vrot.lane.b32.xlu0 %v1053, 19
        %v1058 = vpop.permute.xlu0 %1057
        %1059 = vrot.lane.b32.xlu0 %v1050, 19
        %v1060 = vpop.permute.xlu0 %1059
        %1061 = vrot.lane.b32.xlu0 %v1054, 19
        %v1062 = vpop.permute.xlu0 %1061
        %v1063 = vsel %vm334, %v1056, %v1058
        %v1064 = vsel %vm334, %v1058, %v1060
        %v1065 = vsel %vm334, %v1060, %v1062
        %1069 = vst [vmem:[#allocation3] sm:$0xf] %v1063
        %1070 = vst [vmem:[#allocation3 + $0x8] sm:$0xf] %v1064
        %1071 = vst [vmem:[#allocation3 + $0x10] sm:$0xf] %v1065
        %v1072 = vld [vmem:[#allocation2] sm:$0xff]
        %v1073 = vld [vmem:[#allocation2 + $0x8] sm:$0xff]
        %v1076 = vcombine.low %v1072, %v1072
        %v1077 = vcombine.low %v1073, %v1073
        %1078 = vrot.lane.b32.xlu0 %v1076, 18
        %v1079 = vpop.permute.xlu0 %1078
        %1080 = vrot.lane.b32.xlu0 %v1072, 18
        %v1081 = vpop.permute.xlu0 %1080
        %1082 = vrot.lane.b32.xlu0 %v1077, 18
        %v1083 = vpop.permute.xlu0 %1082
        %1084 = vrot.lane.b32.xlu0 %v1073, 18
        %v1085 = vpop.permute.xlu0 %1084
        %v1086 = vsel %vm358, %v1079, %v1081
        %v1087 = vsel %vm358, %v1081, %v1083
        %v1088 = vsel %vm358, %v1083, %v1085
        %1092 = vst [vmem:[#allocation3] sm:$0xf0] %v1086
        %1093 = vst [vmem:[#allocation3 + $0x8] sm:$0xf0] %v1087
        %1094 = vst [vmem:[#allocation3 + $0x10] sm:$0xf0] %v1088
        %v1095 = vld [vmem:[#allocation2] sm:$0xff]
        %v1096 = vld [vmem:[#allocation2 + $0x8] sm:$0xff]
        %v1099 = vcombine.high %v1095, %v1095
        %v1100 = vcombine.high %v1096, %v1096
        %1101 = vrot.lane.b32.xlu0 %v1095, 17
        %v1102 = vpop.permute.xlu0 %1101
        %1103 = vrot.lane.b32.xlu0 %v1099, 17
        %v1104 = vpop.permute.xlu0 %1103
        %1105 = vrot.lane.b32.xlu0 %v1096, 17
        %v1106 = vpop.permute.xlu0 %1105
        %1107 = vrot.lane.b32.xlu0 %v1100, 17
        %v1108 = vpop.permute.xlu0 %1107
        %v1109 = vsel %vm382, %v1102, %v1104
        %v1110 = vsel %vm382, %v1104, %v1106
        %v1111 = vsel %vm382, %v1106, %v1108
        %1115 = vst [vmem:[#allocation3 + $0x18] sm:$0xf] %v1109
        %1116 = vst [vmem:[#allocation3 + $0x20] sm:$0xf] %v1110
        %1117 = vst [vmem:[#allocation3 + $0x28] sm:$0xf] %v1111
        %v1118 = vld [vmem:[%s4] sm:$0xf]
        %v1119 = vld [vmem:[#allocation3] sm:$0xff]
        %v1120 = vld [vmem:[#allocation3 + $0x8] sm:$0xff]
        %v1121 = vld [vmem:[#allocation3 + $0x10] sm:$0xff]
        %v1122 = vld [vmem:[#allocation3 + $0x18] sm:$0xf]
        %v1123 = vld [vmem:[#allocation3 + $0x20] sm:$0xf]
        %v1124 = vld [vmem:[#allocation3 + $0x28] sm:$0xf]
        %v1125 = vld [vmem:[#allocation2] sm:$0xff]
        %v1126 = vld [vmem:[#allocation2 + $0x8] sm:$0xff]
        %v1129 = vcombine.high %v1125, %v1125
        %v1130 = vcombine.high %v1126, %v1126
        %1131 = vrot.lane.b32.xlu0 %v1125, 1
        %v1132 = vpop.permute.xlu0 %1131
        %1133 = vrot.lane.b32.xlu0 %v1129, 1
        %v1134 = vpop.permute.xlu0 %1133
        %1135 = vrot.lane.b32.xlu0 %v1126, 1
        %v1136 = vpop.permute.xlu0 %1135
        %1137 = vrot.lane.b32.xlu0 %v1130, 1
        %v1138 = vpop.permute.xlu0 %1137
        %v1139 = vsel %vm413, %v1132, %v1134
        %v1140 = vsel %vm413, %v1134, %v1136
        %v1141 = vsel %vm413, %v1136, %v1138
        %1145 = vst [vmem:[#allocation4] sm:$0xf] %v1139
        %1146 = vst [vmem:[#allocation4 + $0x8] sm:$0xf] %v1140
        %1147 = vst [vmem:[#allocation4 + $0x10] sm:$0xf] %v1141
        %v1148 = vld [vmem:[#allocation2 + $0x4] sm:$0xff]
        %v1149 = vld [vmem:[#allocation2 + $0xc] sm:$0xf]
        %v1152 = vcombine.low %v1148, %v1148
        %v1153 = vcombine.low %v1149, %v1149
        %1156 = vst [vmem:[#allocation4] sm:$0xf0] %v1152
        %1157 = vst [vmem:[#allocation4 + $0x8] sm:$0xf0] %v1148
        %1158 = vst [vmem:[#allocation4 + $0x10] sm:$0xf0] %v1153
        %v1159 = vld [vmem:[#allocation2 + $0x4] sm:$0xff]
        %v1160 = vld [vmem:[#allocation2 + $0xc] sm:$0xff]
        %v1163 = vcombine.high %v1159, %v1159
        %v1164 = vcombine.high %v1160, %v1160
        %1165 = vrot.lane.b32.xlu0 %v1159, 127
        %v1166 = vpop.permute.xlu0 %1165
        %1167 = vrot.lane.b32.xlu0 %v1163, 127
        %v1168 = vpop.permute.xlu0 %1167
        %1169 = vrot.lane.b32.xlu0 %v1160, 127
        %v1170 = vpop.permute.xlu0 %1169
        %1171 = vrot.lane.b32.xlu0 %v1164, 127
        %v1172 = vpop.permute.xlu0 %1171
        %v1173 = vsel %vm448, %v1166, %v1168
        %v1174 = vsel %vm448, %v1168, %v1170
        %v1175 = vsel %vm448, %v1170, %v1172
        %1179 = vst [vmem:[#allocation4 + $0x18] sm:$0xf] %v1173
        %1180 = vst [vmem:[#allocation4 + $0x20] sm:$0xf] %v1174
        %1181 = vst [vmem:[#allocation4 + $0x28] sm:$0xf] %v1175
        %v1182 = vld [vmem:[%s4] sm:$0xf]
        %v1183 = vld [vmem:[#allocation4] sm:$0xff]
        %v1184 = vld [vmem:[#allocation4 + $0x8] sm:$0xff]
        %v1185 = vld [vmem:[#allocation4 + $0x10] sm:$0xff]
        %v1186 = vld [vmem:[#allocation4 + $0x18] sm:$0xf]
        %v1187 = vld [vmem:[#allocation4 + $0x20] sm:$0xf]
        %v1188 = vld [vmem:[#allocation4 + $0x28] sm:$0xf]
        %1190 = vrot.lane.b32.xlu0 %v1182, 116
        %v1191 = vpop.permute.xlu0 %1190
        %v1192 = vsel %vm468, %v1191, 0
        %v1195 = vsel %vm471, %v1186, 0
        %v1198 = vsel %vm471, %v1187, 0
        %v1201 = vsel %vm471, %v1188, 0
        %1203 = vmatprep.subr.mxu0 %v1184
        %1204 = vmatpush1.msra.mxu0 %v1183
        %1205 = vmatprep.subr.mxu0 %v1198
        %1206 = vmatpush1.msra.mxu0 %v1195
        %1207 = vmatprep.subr.mxu0 0.0
        %1208 = vmatpush1.msra.mxu0 0.0
        %1209 = vmatprep.subr.mxu0 0.0
        %1210 = vmatpush1.msra.mxu0 0.0
        %1211 = vmatprep.subr.mxu0 0.0
        %1212 = vmatpush1.msra.mxu0 0.0
        %1213 = vmatprep.subr.mxu0 0.0
        %1214 = vmatpush1.msra.mxu0 0.0
        %1215 = vmatprep.subr.mxu0 0.0
        %1216 = vmatpush1.msra.mxu0 0.0
        %1217 = vmatprep.subr.mxu0 0.0
        %1218 = vmatpush1.msra.mxu0 0.0
        %1219 = vmatprep.subr.mxu0 0.0
        %1220 = vmatpush1.msra.mxu0 0.0
        %1221 = vmatprep.subr.mxu0 0.0
        %1222 = vmatpush1.msra.mxu0 0.0
        %1223 = vmatprep.subr.mxu0 0.0
        %1224 = vmatpush1.msra.mxu0 0.0
        %1225 = vmatprep.subr.mxu0 0.0
        %1226 = vmatpush1.msra.mxu0 0.0
        %1227 = vmatprep.subr.mxu0 0.0
        %1228 = vmatpush1.msra.mxu0 0.0
        %1229 = vmatprep.subr.mxu0 0.0
        %1230 = vmatpush1.msra.mxu0 0.0
        %1231 = vmatprep.subr.mxu0 0.0
        %1232 = vmatpush1.msra.mxu0 0.0
        %1233 = vmatprep.subr.mxu0 0.0
        %1234 = vmatpush1.msra.mxu0 0.0
        %1235 = vmatprep.subr.mxu0 0.0
        %1236 = vmatpush1.msra.mxu0 0.0
        %1237 = vmatprep.subr.mxu0 0.0
        %1238 = vmatpush1.msra.mxu0 0.0
        %1239 = vmatprep.subr.mxu0 0.0
        %1240 = vmatpush1.msra.mxu0 0.0
        %1241 = vmatprep.subr.mxu0 0.0
        %1242 = vmatpush1.msra.mxu0 0.0
        %1243 = vmatprep.subr.mxu0 0.0
        %1244 = vmatpush1.msra.mxu0 0.0
        %1245 = vmatprep.subr.mxu0 0.0
        %1246 = vmatpush1.msra.mxu0 0.0
        %1247 = vmatprep.subr.mxu0 0.0
        %1248 = vmatpush1.msra.mxu0 0.0
        %1249 = vmatprep.subr.mxu0 0.0
        %1250 = vmatpush1.msra.mxu0 0.0
        %1251 = vmatprep.subr.mxu0 0.0
        %1252 = vmatpush1.msra.mxu0 0.0
        %1253 = vmatprep.subr.mxu0 0.0
        %1254 = vmatpush1.msra.mxu0 0.0
        %1255 = vmatprep.subr.mxu0 0.0
        %1256 = vmatpush1.msra.mxu0 0.0
        %1257 = vmatprep.subr.mxu0 0.0
        %1258 = vmatpush1.msra.mxu0 0.0
        %1259 = vmatprep.subr.mxu0 0.0
        %1260 = vmatpush1.msra.mxu0 0.0
        %1261 = vmatprep.subr.mxu0 0.0
        %1262 = vmatpush1.msra.mxu0 0.0
        %1263 = vmatprep.subr.mxu0 0.0
        %1264 = vmatpush1.msra.mxu0 0.0
        %1265 = vmatprep.subr.mxu0 0.0
        %1266 = vmatpush1.msra.mxu0 0.0
        %1267 = vmatprep.mubr.f32.mxu0 0.0
        %1268 = vmatmul.mubr.f32.gmra.mrb[0].mxu0 %v1192
        %v1269 = vpop.f32.mrb[0].mxu0
        %v1270 = vadd.f32 0.0, %v1269
        %v1271 = vpop.f32.mrb[0].mxu0
        %v1272 = vadd.f32 0.0, %v1271
        %1273 = vdwg.mxu0
        %1274 = vmatprep.subr.mxu0 0.0
        %1275 = vmatpush1.msra.mxu0 %v1185
        %1276 = vmatprep.subr.mxu0 0.0
        %1277 = vmatpush1.msra.mxu0 %v1201
        %1278 = vmatprep.subr.mxu0 0.0
        %1279 = vmatpush1.msra.mxu0 0.0
        %1280 = vmatprep.subr.mxu0 0.0
        %1281 = vmatpush1.msra.mxu0 0.0
        %1282 = vmatprep.subr.mxu0 0.0
        %1283 = vmatpush1.msra.mxu0 0.0
        %1284 = vmatprep.subr.mxu0 0.0
        %1285 = vmatpush1.msra.mxu0 0.0
        %1286 = vmatprep.subr.mxu0 0.0
        %1287 = vmatpush1.msra.mxu0 0.0
        %1288 = vmatprep.subr.mxu0 0.0
        %1289 = vmatpush1.msra.mxu0 0.0
        %1290 = vmatprep.subr.mxu0 0.0
        %1291 = vmatpush1.msra.mxu0 0.0
        %1292 = vmatprep.subr.mxu0 0.0
        %1293 = vmatpush1.msra.mxu0 0.0
        %1294 = vmatprep.subr.mxu0 0.0
        %1295 = vmatpush1.msra.mxu0 0.0
        %1296 = vmatprep.subr.mxu0 0.0
        %1297 = vmatpush1.msra.mxu0 0.0
        %1298 = vmatprep.subr.mxu0 0.0
        %1299 = vmatpush1.msra.mxu0 0.0
        %1300 = vmatprep.subr.mxu0 0.0
        %1301 = vmatpush1.msra.mxu0 0.0
        %1302 = vmatprep.subr.mxu0 0.0
        %1303 = vmatpush1.msra.mxu0 0.0
        %1304 = vmatprep.subr.mxu0 0.0
        %1305 = vmatpush1.msra.mxu0 0.0
        %1306 = vmatprep.subr.mxu0 0.0
        %1307 = vmatpush1.msra.mxu0 0.0
        %1308 = vmatprep.subr.mxu0 0.0
        %1309 = vmatpush1.msra.mxu0 0.0
        %1310 = vmatprep.subr.mxu0 0.0
        %1311 = vmatpush1.msra.mxu0 0.0
        %1312 = vmatprep.subr.mxu0 0.0
        %1313 = vmatpush1.msra.mxu0 0.0
        %1314 = vmatprep.subr.mxu0 0.0
        %1315 = vmatpush1.msra.mxu0 0.0
        %1316 = vmatprep.subr.mxu0 0.0
        %1317 = vmatpush1.msra.mxu0 0.0
        %1318 = vmatprep.subr.mxu0 0.0
        %1319 = vmatpush1.msra.mxu0 0.0
        %1320 = vmatprep.subr.mxu0 0.0
        %1321 = vmatpush1.msra.mxu0 0.0
        %1322 = vmatprep.subr.mxu0 0.0
        %1323 = vmatpush1.msra.mxu0 0.0
        %1324 = vmatprep.subr.mxu0 0.0
        %1325 = vmatpush1.msra.mxu0 0.0
        %1326 = vmatprep.subr.mxu0 0.0
        %1327 = vmatpush1.msra.mxu0 0.0
        %1328 = vmatprep.subr.mxu0 0.0
        %1329 = vmatpush1.msra.mxu0 0.0
        %1330 = vmatprep.subr.mxu0 0.0
        %1331 = vmatpush1.msra.mxu0 0.0
        %1332 = vmatprep.subr.mxu0 0.0
        %1333 = vmatpush1.msra.mxu0 0.0
        %1334 = vmatprep.subr.mxu0 0.0
        %1335 = vmatpush1.msra.mxu0 0.0
        %1336 = vmatprep.subr.mxu0 0.0
        %1337 = vmatpush1.msra.mxu0 0.0
        %1338 = vmatprep.mubr.f32.mxu0 0.0
        %1339 = vmatmul.mubr.f32.gmra.mrb[0].mxu0 %v1192
        %v1340 = vpop.f32.mrb[0].mxu0
        %v1341 = vadd.f32 0.0, %v1340
        %v1342 = vpop.f32.mrb[0].mxu0
        %1343 = vdwg.mxu0
        %v1345 = vsel %vm468, %v1118, 0
        %v1348 = vsel %vm471, %v1122, 0
        %v1351 = vsel %vm471, %v1123, 0
        %v1354 = vsel %vm471, %v1124, 0
        %1356 = vmatprep.subr.mxu0 %v1120
        %1357 = vmatpush1.msra.mxu0 %v1119
        %1358 = vmatprep.subr.mxu0 %v1351
        %1359 = vmatpush1.msra.mxu0 %v1348
        %1360 = vmatprep.subr.mxu0 0.0
        %1361 = vmatpush1.msra.mxu0 0.0
        %1362 = vmatprep.subr.mxu0 0.0
        %1363 = vmatpush1.msra.mxu0 0.0
        %1364 = vmatprep.subr.mxu0 0.0
        %1365 = vmatpush1.msra.mxu0 0.0
        %1366 = vmatprep.subr.mxu0 0.0
        %1367 = vmatpush1.msra.mxu0 0.0
        %1368 = vmatprep.subr.mxu0 0.0
        %1369 = vmatpush1.msra.mxu0 0.0
        %1370 = vmatprep.subr.mxu0 0.0
        %1371 = vmatpush1.msra.mxu0 0.0
        %1372 = vmatprep.subr.mxu0 0.0
        %1373 = vmatpush1.msra.mxu0 0.0
        %1374 = vmatprep.subr.mxu0 0.0
        %1375 = vmatpush1.msra.mxu0 0.0
        %1376 = vmatprep.subr.mxu0 0.0
        %1377 = vmatpush1.msra.mxu0 0.0
        %1378 = vmatprep.subr.mxu0 0.0
        %1379 = vmatpush1.msra.mxu0 0.0
        %1380 = vmatprep.subr.mxu0 0.0
        %1381 = vmatpush1.msra.mxu0 0.0
        %1382 = vmatprep.subr.mxu0 0.0
        %1383 = vmatpush1.msra.mxu0 0.0
        %1384 = vmatprep.subr.mxu0 0.0
        %1385 = vmatpush1.msra.mxu0 0.0
        %1386 = vmatprep.subr.mxu0 0.0
        %1387 = vmatpush1.msra.mxu0 0.0
        %1388 = vmatprep.subr.mxu0 0.0
        %1389 = vmatpush1.msra.mxu0 0.0
        %1390 = vmatprep.subr.mxu0 0.0
        %1391 = vmatpush1.msra.mxu0 0.0
        %1392 = vmatprep.subr.mxu0 0.0
        %1393 = vmatpush1.msra.mxu0 0.0
        %1394 = vmatprep.subr.mxu0 0.0
        %1395 = vmatpush1.msra.mxu0 0.0
        %1396 = vmatprep.subr.mxu0 0.0
        %1397 = vmatpush1.msra.mxu0 0.0
        %1398 = vmatprep.subr.mxu0 0.0
        %1399 = vmatpush1.msra.mxu0 0.0
        %1400 = vmatprep.subr.mxu0 0.0
        %1401 = vmatpush1.msra.mxu0 0.0
        %1402 = vmatprep.subr.mxu0 0.0
        %1403 = vmatpush1.msra.mxu0 0.0
        %1404 = vmatprep.subr.mxu0 0.0
        %1405 = vmatpush1.msra.mxu0 0.0
        %1406 = vmatprep.subr.mxu0 0.0
        %1407 = vmatpush1.msra.mxu0 0.0
        %1408 = vmatprep.subr.mxu0 0.0
        %1409 = vmatpush1.msra.mxu0 0.0
        %1410 = vmatprep.subr.mxu0 0.0
        %1411 = vmatpush1.msra.mxu0 0.0
        %1412 = vmatprep.subr.mxu0 0.0
        %1413 = vmatpush1.msra.mxu0 0.0
        %1414 = vmatprep.subr.mxu0 0.0
        %1415 = vmatpush1.msra.mxu0 0.0
        %1416 = vmatprep.subr.mxu0 0.0
        %1417 = vmatpush1.msra.mxu0 0.0
        %1418 = vmatprep.subr.mxu0 0.0
        %1419 = vmatpush1.msra.mxu0 0.0
        %1420 = vmatprep.mubr.f32.mxu0 0.0
        %1421 = vmatmul.mubr.f32.gmra.mrb[0].mxu0 %v1345
        %v1422 = vpop.f32.mrb[0].mxu0
        %v1423 = vadd.f32 %v1270, %v1422
        %v1424 = vpop.f32.mrb[0].mxu0
        %v1425 = vadd.f32 %v1272, %v1424
        %1426 = vdwg.mxu0
        %1427 = vmatprep.subr.mxu0 0.0
        %1428 = vmatpush1.msra.mxu0 %v1121
        %1429 = vmatprep.subr.mxu0 0.0
        %1430 = vmatpush1.msra.mxu0 %v1354
        %1431 = vmatprep.subr.mxu0 0.0
        %1432 = vmatpush1.msra.mxu0 0.0
        %1433 = vmatprep.subr.mxu0 0.0
        %1434 = vmatpush1.msra.mxu0 0.0
        %1435 = vmatprep.subr.mxu0 0.0
        %1436 = vmatpush1.msra.mxu0 0.0
        %1437 = vmatprep.subr.mxu0 0.0
        %1438 = vmatpush1.msra.mxu0 0.0
        %1439 = vmatprep.subr.mxu0 0.0
        %1440 = vmatpush1.msra.mxu0 0.0
        %1441 = vmatprep.subr.mxu0 0.0
        %1442 = vmatpush1.msra.mxu0 0.0
        %1443 = vmatprep.subr.mxu0 0.0
        %1444 = vmatpush1.msra.mxu0 0.0
        %1445 = vmatprep.subr.mxu0 0.0
        %1446 = vmatpush1.msra.mxu0 0.0
        %1447 = vmatprep.subr.mxu0 0.0
        %1448 = vmatpush1.msra.mxu0 0.0
        %1449 = vmatprep.subr.mxu0 0.0
        %1450 = vmatpush1.msra.mxu0 0.0
        %1451 = vmatprep.subr.mxu0 0.0
        %1452 = vmatpush1.msra.mxu0 0.0
        %1453 = vmatprep.subr.mxu0 0.0
        %1454 = vmatpush1.msra.mxu0 0.0
        %1455 = vmatprep.subr.mxu0 0.0
        %1456 = vmatpush1.msra.mxu0 0.0
        %1457 = vmatprep.subr.mxu0 0.0
        %1458 = vmatpush1.msra.mxu0 0.0
        %1459 = vmatprep.subr.mxu0 0.0
        %1460 = vmatpush1.msra.mxu0 0.0
        %1461 = vmatprep.subr.mxu0 0.0
        %1462 = vmatpush1.msra.mxu0 0.0
        %1463 = vmatprep.subr.mxu0 0.0
        %1464 = vmatpush1.msra.mxu0 0.0
        %1465 = vmatprep.subr.mxu0 0.0
        %1466 = vmatpush1.msra.mxu0 0.0
        %1467 = vmatprep.subr.mxu0 0.0
        %1468 = vmatpush1.msra.mxu0 0.0
        %1469 = vmatprep.subr.mxu0 0.0
        %1470 = vmatpush1.msra.mxu0 0.0
        %1471 = vmatprep.subr.mxu0 0.0
        %1472 = vmatpush1.msra.mxu0 0.0
        %1473 = vmatprep.subr.mxu0 0.0
        %1474 = vmatpush1.msra.mxu0 0.0
        %1475 = vmatprep.subr.mxu0 0.0
        %1476 = vmatpush1.msra.mxu0 0.0
        %1477 = vmatprep.subr.mxu0 0.0
        %1478 = vmatpush1.msra.mxu0 0.0
        %1479 = vmatprep.subr.mxu0 0.0
        %1480 = vmatpush1.msra.mxu0 0.0
        %1481 = vmatprep.subr.mxu0 0.0
        %1482 = vmatpush1.msra.mxu0 0.0
        %1483 = vmatprep.subr.mxu0 0.0
        %1484 = vmatpush1.msra.mxu0 0.0
        %1485 = vmatprep.subr.mxu0 0.0
        %1486 = vmatpush1.msra.mxu0 0.0
        %1487 = vmatprep.subr.mxu0 0.0
        %1488 = vmatpush1.msra.mxu0 0.0
        %1489 = vmatprep.subr.mxu0 0.0
        %1490 = vmatpush1.msra.mxu0 0.0
        %1491 = vmatprep.mubr.f32.mxu0 0.0
        %1492 = vmatmul.mubr.f32.gmra.mrb[0].mxu0 %v1345
        %v1493 = vpop.f32.mrb[0].mxu0
        %v1494 = vadd.f32 %v1341, %v1493
        %v1495 = vpop.f32.mrb[0].mxu0
        %1496 = vdwg.mxu0
        %v1497 = vld [vmem:[#allocation2 + $0x4] sm:$0xff]
        %v1498 = vld [vmem:[#allocation2 + $0xc] sm:$0xff]
        %v1501 = vcombine.high %v1497, %v1497
        %v1502 = vcombine.high %v1498, %v1498
        %1503 = vrot.lane.b32.xlu0 %v1497, 111
        %v1504 = vpop.permute.xlu0 %1503
        %1505 = vrot.lane.b32.xlu0 %v1501, 111
        %v1506 = vpop.permute.xlu0 %1505
        %1507 = vrot.lane.b32.xlu0 %v1498, 111
        %v1508 = vpop.permute.xlu0 %1507
        %1509 = vrot.lane.b32.xlu0 %v1502, 111
        %v1510 = vpop.permute.xlu0 %1509
        %v1511 = vsel %vm789, %v1504, %v1506
        %v1512 = vsel %vm789, %v1506, %v1508
        %v1513 = vsel %vm789, %v1508, %v1510
        %1517 = vst [vmem:[#allocation3] sm:$0xf] %v1511
        %1518 = vst [vmem:[#allocation3 + $0x8] sm:$0xf] %v1512
        %1519 = vst [vmem:[#allocation3 + $0x10] sm:$0xf] %v1513
        %v1520 = vld [vmem:[#allocation2 + $0x4] sm:$0xff]
        %v1521 = vld [vmem:[#allocation2 + $0xc] sm:$0xff]
        %v1524 = vcombine.low %v1520, %v1520
        %v1525 = vcombine.low %v1521, %v1521
        %1526 = vrot.lane.b32.xlu0 %v1524, 110
        %v1527 = vpop.permute.xlu0 %1526
        %1528 = vrot.lane.b32.xlu0 %v1520, 110
        %v1529 = vpop.permute.xlu0 %1528
        %1530 = vrot.lane.b32.xlu0 %v1525, 110
        %v1531 = vpop.permute.xlu0 %1530
        %1532 = vrot.lane.b32.xlu0 %v1521, 110
        %v1533 = vpop.permute.xlu0 %1532
        %v1534 = vsel %vm813, %v1527, %v1529
        %v1535 = vsel %vm813, %v1529, %v1531
        %v1536 = vsel %vm813, %v1531, %v1533
        %1540 = vst [vmem:[#allocation3] sm:$0xf0] %v1534
        %1541 = vst [vmem:[#allocation3 + $0x8] sm:$0xf0] %v1535
        %1542 = vst [vmem:[#allocation3 + $0x10] sm:$0xf0] %v1536
        %v1543 = vld [vmem:[#allocation2 + $0x4] sm:$0xff]
        %v1544 = vld [vmem:[#allocation2 + $0xc] sm:$0xff]
        %v1547 = vcombine.high %v1543, %v1543
        %v1548 = vcombine.high %v1544, %v1544
        %1549 = vrot.lane.b32.xlu0 %v1543, 109
        %v1550 = vpop.permute.xlu0 %1549
        %1551 = vrot.lane.b32.xlu0 %v1547, 109
        %v1552 = vpop.permute.xlu0 %1551
        %1553 = vrot.lane.b32.xlu0 %v1544, 109
        %v1554 = vpop.permute.xlu0 %1553
        %1555 = vrot.lane.b32.xlu0 %v1548, 109
        %v1556 = vpop.permute.xlu0 %1555
        %v1557 = vsel %vm837, %v1550, %v1552
        %v1558 = vsel %vm837, %v1552, %v1554
        %v1559 = vsel %vm837, %v1554, %v1556
        %1563 = vst [vmem:[#allocation3 + $0x18] sm:$0xf] %v1557
        %1564 = vst [vmem:[#allocation3 + $0x20] sm:$0xf] %v1558
        %1565 = vst [vmem:[#allocation3 + $0x28] sm:$0xf] %v1559
        %v1566 = vld [vmem:[%s4] sm:$0xf]
        %v1567 = vld [vmem:[#allocation3] sm:$0xff]
        %v1568 = vld [vmem:[#allocation3 + $0x8] sm:$0xff]
        %v1569 = vld [vmem:[#allocation3 + $0x10] sm:$0xff]
        %v1570 = vld [vmem:[#allocation3 + $0x18] sm:$0xf]
        %v1571 = vld [vmem:[#allocation3 + $0x20] sm:$0xf]
        %v1572 = vld [vmem:[#allocation3 + $0x28] sm:$0xf]
        %1574 = vrot.lane.b32.xlu0 %v1566, 104
        %v1575 = vpop.permute.xlu0 %1574
        %v1576 = vsel %vm468, %v1575, 0
        %v1579 = vsel %vm471, %v1570, 0
        %v1582 = vsel %vm471, %v1571, 0
        %v1585 = vsel %vm471, %v1572, 0
        %1587 = vmatprep.subr.mxu0 %v1568
        %1588 = vmatpush1.msra.mxu0 %v1567
        %1589 = vmatprep.subr.mxu0 %v1582
        %1590 = vmatpush1.msra.mxu0 %v1579
        %1591 = vmatprep.subr.mxu0 0.0
        %1592 = vmatpush1.msra.mxu0 0.0
        %1593 = vmatprep.subr.mxu0 0.0
        %1594 = vmatpush1.msra.mxu0 0.0
        %1595 = vmatprep.subr.mxu0 0.0
        %1596 = vmatpush1.msra.mxu0 0.0
        %1597 = vmatprep.subr.mxu0 0.0
        %1598 = vmatpush1.msra.mxu0 0.0
        %1599 = vmatprep.subr.mxu0 0.0
        %1600 = vmatpush1.msra.mxu0 0.0
        %1601 = vmatprep.subr.mxu0 0.0
        %1602 = vmatpush1.msra.mxu0 0.0
        %1603 = vmatprep.subr.mxu0 0.0
        %1604 = vmatpush1.msra.mxu0 0.0
        %1605 = vmatprep.subr.mxu0 0.0
        %1606 = vmatpush1.msra.mxu0 0.0
        %1607 = vmatprep.subr.mxu0 0.0
        %1608 = vmatpush1.msra.mxu0 0.0
        %1609 = vmatprep.subr.mxu0 0.0
        %1610 = vmatpush1.msra.mxu0 0.0
        %1611 = vmatprep.subr.mxu0 0.0
        %1612 = vmatpush1.msra.mxu0 0.0
        %1613 = vmatprep.subr.mxu0 0.0
        %1614 = vmatpush1.msra.mxu0 0.0
        %1615 = vmatprep.subr.mxu0 0.0
        %1616 = vmatpush1.msra.mxu0 0.0
        %1617 = vmatprep.subr.mxu0 0.0
        %1618 = vmatpush1.msra.mxu0 0.0
        %1619 = vmatprep.subr.mxu0 0.0
        %1620 = vmatpush1.msra.mxu0 0.0
        %1621 = vmatprep.subr.mxu0 0.0
        %1622 = vmatpush1.msra.mxu0 0.0
        %1623 = vmatprep.subr.mxu0 0.0
        %1624 = vmatpush1.msra.mxu0 0.0
        %1625 = vmatprep.subr.mxu0 0.0
        %1626 = vmatpush1.msra.mxu0 0.0
        %1627 = vmatprep.subr.mxu0 0.0
        %1628 = vmatpush1.msra.mxu0 0.0
        %1629 = vmatprep.subr.mxu0 0.0
        %1630 = vmatpush1.msra.mxu0 0.0
        %1631 = vmatprep.subr.mxu0 0.0
        %1632 = vmatpush1.msra.mxu0 0.0
        %1633 = vmatprep.subr.mxu0 0.0
        %1634 = vmatpush1.msra.mxu0 0.0
        %1635 = vmatprep.subr.mxu0 0.0
        %1636 = vmatpush1.msra.mxu0 0.0
        %1637 = vmatprep.subr.mxu0 0.0
        %1638 = vmatpush1.msra.mxu0 0.0
        %1639 = vmatprep.subr.mxu0 0.0
        %1640 = vmatpush1.msra.mxu0 0.0
        %1641 = vmatprep.subr.mxu0 0.0
        %1642 = vmatpush1.msra.mxu0 0.0
        %1643 = vmatprep.subr.mxu0 0.0
        %1644 = vmatpush1.msra.mxu0 0.0
        %1645 = vmatprep.subr.mxu0 0.0
        %1646 = vmatpush1.msra.mxu0 0.0
        %1647 = vmatprep.subr.mxu0 0.0
        %1648 = vmatpush1.msra.mxu0 0.0
        %1649 = vmatprep.subr.mxu0 0.0
        %1650 = vmatpush1.msra.mxu0 0.0
        %1651 = vmatprep.mubr.f32.mxu0 0.0
        %1652 = vmatmul.mubr.f32.gmra.mrb[0].mxu0 %v1576
        %v1653 = vpop.f32.mrb[0].mxu0
        %v1654 = vadd.f32 0.0, %v1653
        %v1655 = vpop.f32.mrb[0].mxu0
        %v1656 = vadd.f32 0.0, %v1655
        %1657 = vdwg.mxu0
        %1658 = vmatprep.subr.mxu0 0.0
        %1659 = vmatpush1.msra.mxu0 %v1569
        %1660 = vmatprep.subr.mxu0 0.0
        %1661 = vmatpush1.msra.mxu0 %v1585
        %1662 = vmatprep.subr.mxu0 0.0
        %1663 = vmatpush1.msra.mxu0 0.0
        %1664 = vmatprep.subr.mxu0 0.0
        %1665 = vmatpush1.msra.mxu0 0.0
        %1666 = vmatprep.subr.mxu0 0.0
        %1667 = vmatpush1.msra.mxu0 0.0
        %1668 = vmatprep.subr.mxu0 0.0
        %1669 = vmatpush1.msra.mxu0 0.0
        %1670 = vmatprep.subr.mxu0 0.0
        %1671 = vmatpush1.msra.mxu0 0.0
        %1672 = vmatprep.subr.mxu0 0.0
        %1673 = vmatpush1.msra.mxu0 0.0
        %1674 = vmatprep.subr.mxu0 0.0
        %1675 = vmatpush1.msra.mxu0 0.0
        %1676 = vmatprep.subr.mxu0 0.0
        %1677 = vmatpush1.msra.mxu0 0.0
        %1678 = vmatprep.subr.mxu0 0.0
        %1679 = vmatpush1.msra.mxu0 0.0
        %1680 = vmatprep.subr.mxu0 0.0
        %1681 = vmatpush1.msra.mxu0 0.0
        %1682 = vmatprep.subr.mxu0 0.0
        %1683 = vmatpush1.msra.mxu0 0.0
        %1684 = vmatprep.subr.mxu0 0.0
        %1685 = vmatpush1.msra.mxu0 0.0
        %1686 = vmatprep.subr.mxu0 0.0
        %1687 = vmatpush1.msra.mxu0 0.0
        %1688 = vmatprep.subr.mxu0 0.0
        %1689 = vmatpush1.msra.mxu0 0.0
        %1690 = vmatprep.subr.mxu0 0.0
        %1691 = vmatpush1.msra.mxu0 0.0
        %1692 = vmatprep.subr.mxu0 0.0
        %1693 = vmatpush1.msra.mxu0 0.0
        %1694 = vmatprep.subr.mxu0 0.0
        %1695 = vmatpush1.msra.mxu0 0.0
        %1696 = vmatprep.subr.mxu0 0.0
        %1697 = vmatpush1.msra.mxu0 0.0
        %1698 = vmatprep.subr.mxu0 0.0
        %1699 = vmatpush1.msra.mxu0 0.0
        %1700 = vmatprep.subr.mxu0 0.0
        %1701 = vmatpush1.msra.mxu0 0.0
        %1702 = vmatprep.subr.mxu0 0.0
        %1703 = vmatpush1.msra.mxu0 0.0
        %1704 = vmatprep.subr.mxu0 0.0
        %1705 = vmatpush1.msra.mxu0 0.0
        %1706 = vmatprep.subr.mxu0 0.0
        %1707 = vmatpush1.msra.mxu0 0.0
        %1708 = vmatprep.subr.mxu0 0.0
        %1709 = vmatpush1.msra.mxu0 0.0
        %1710 = vmatprep.subr.mxu0 0.0
        %1711 = vmatpush1.msra.mxu0 0.0
        %1712 = vmatprep.subr.mxu0 0.0
        %1713 = vmatpush1.msra.mxu0 0.0
        %1714 = vmatprep.subr.mxu0 0.0
        %1715 = vmatpush1.msra.mxu0 0.0
        %1716 = vmatprep.subr.mxu0 0.0
        %1717 = vmatpush1.msra.mxu0 0.0
        %1718 = vmatprep.subr.mxu0 0.0
        %1719 = vmatpush1.msra.mxu0 0.0
        %1720 = vmatprep.subr.mxu0 0.0
        %1721 = vmatpush1.msra.mxu0 0.0
        %1722 = vmatprep.mubr.f32.mxu0 0.0
        %1723 = vmatmul.mubr.f32.gmra.mrb[0].mxu0 %v1576
        %v1724 = vpop.f32.mrb[0].mxu0
        %v1725 = vadd.f32 0.0, %v1724
        %v1726 = vpop.f32.mrb[0].mxu0
        %1727 = vdwg.mxu0
        %v1728 = vadd.f32 %v1423, %v1654
        %v1729 = vadd.f32 %v1425, %v1656
        %v1730 = vadd.f32 %v1494, %v1725
        %v1732 = vcombine.high %v317, %v317
        %v1734 = vadd.f32 %v1728, %v317
        %v1735 = vadd.f32 %v1729, %v1732
        %v1736 = vadd.f32 %v1730, %v318
        %v1737 = vld [vmem:[%s5] sm:$0xf]
        %v1738 = vld [vmem:[%s6] sm:$0xf]
        %1740 = vset.pattern.permute.xlu0 0
        %1741 = vperm.xlu0 %1740, %v1738
        %v1742 = vpop.permute.xlu0 %1741
        %vm1744 = vcmask 31744
        %v1746 = vsel %vm1744, %v1737, 0
        %v1749 = vsel %vm471, %v1734, 0
        %v1752 = vsel %vm471, %v1735, 0
        %v1755 = vsel %vm471, %v1736, 0
        %1757 = vmatprep.subr.mxu0 %v1752
        %1758 = vmatpush1.msra.mxu0 %v1749
        %1759 = vmatprep.subr.mxu0 0.0
        %1760 = vmatpush1.msra.mxu0 0.0
        %1761 = vmatprep.subr.mxu0 0.0
        %1762 = vmatpush1.msra.mxu0 0.0
        %1763 = vmatprep.subr.mxu0 0.0
        %1764 = vmatpush1.msra.mxu0 0.0
        %1765 = vmatprep.subr.mxu0 0.0
        %1766 = vmatpush1.msra.mxu0 0.0
        %1767 = vmatprep.subr.mxu0 0.0
        %1768 = vmatpush1.msra.mxu0 0.0
        %1769 = vmatprep.subr.mxu0 0.0
        %1770 = vmatpush1.msra.mxu0 0.0
        %1771 = vmatprep.subr.mxu0 0.0
        %1772 = vmatpush1.msra.mxu0 0.0
        %1773 = vmatprep.subr.mxu0 0.0
        %1774 = vmatpush1.msra.mxu0 0.0
        %1775 = vmatprep.subr.mxu0 0.0
        %1776 = vmatpush1.msra.mxu0 0.0
        %1777 = vmatprep.subr.mxu0 0.0
        %1778 = vmatpush1.msra.mxu0 0.0
        %1779 = vmatprep.subr.mxu0 0.0
        %1780 = vmatpush1.msra.mxu0 0.0
        %1781 = vmatprep.subr.mxu0 0.0
        %1782 = vmatpush1.msra.mxu0 0.0
        %1783 = vmatprep.subr.mxu0 0.0
        %1784 = vmatpush1.msra.mxu0 0.0
        %1785 = vmatprep.subr.mxu0 0.0
        %1786 = vmatpush1.msra.mxu0 0.0
        %1787 = vmatprep.subr.mxu0 0.0
        %1788 = vmatpush1.msra.mxu0 0.0
        %1789 = vmatprep.subr.mxu0 0.0
        %1790 = vmatpush1.msra.mxu0 0.0
        %1791 = vmatprep.subr.mxu0 0.0
        %1792 = vmatpush1.msra.mxu0 0.0
        %1793 = vmatprep.subr.mxu0 0.0
        %1794 = vmatpush1.msra.mxu0 0.0
        %1795 = vmatprep.subr.mxu0 0.0
        %1796 = vmatpush1.msra.mxu0 0.0
        %1797 = vmatprep.subr.mxu0 0.0
        %1798 = vmatpush1.msra.mxu0 0.0
        %1799 = vmatprep.subr.mxu0 0.0
        %1800 = vmatpush1.msra.mxu0 0.0
        %1801 = vmatprep.subr.mxu0 0.0
        %1802 = vmatpush1.msra.mxu0 0.0
        %1803 = vmatprep.subr.mxu0 0.0
        %1804 = vmatpush1.msra.mxu0 0.0
        %1805 = vmatprep.subr.mxu0 0.0
        %1806 = vmatpush1.msra.mxu0 0.0
        %1807 = vmatprep.subr.mxu0 0.0
        %1808 = vmatpush1.msra.mxu0 0.0
        %1809 = vmatprep.subr.mxu0 0.0
        %1810 = vmatpush1.msra.mxu0 0.0
        %1811 = vmatprep.subr.mxu0 0.0
        %1812 = vmatpush1.msra.mxu0 0.0
        %1813 = vmatprep.subr.mxu0 0.0
        %1814 = vmatpush1.msra.mxu0 0.0
        %1815 = vmatprep.subr.mxu0 0.0
        %1816 = vmatpush1.msra.mxu0 0.0
        %1817 = vmatprep.subr.mxu0 0.0
        %1818 = vmatpush1.msra.mxu0 0.0
        %1819 = vmatprep.subr.mxu0 0.0
        %1820 = vmatpush1.msra.mxu0 0.0
        %1821 = vmatprep.mubr.f32.mxu0 0.0
        %1822 = vmatmul.mubr.f32.gmra.mrb[0].mxu0 %v1746
        %v1823 = vpop.f32.mrb[0].mxu0
        %v1824 = vadd.f32 %v1742, %v1823
        %v1825 = vpop.f32.mrb[0].mxu0
        %v1826 = vadd.f32 %v1742, %v1825
        %1827 = vdwg.mxu0
        %1828 = vmatprep.subr.mxu0 0.0
        %1829 = vmatpush1.msra.mxu0 %v1755
        %1830 = vmatprep.subr.mxu0 0.0
        %1831 = vmatpush1.msra.mxu0 0.0
        %1832 = vmatprep.subr.mxu0 0.0
        %1833 = vmatpush1.msra.mxu0 0.0
        %1834 = vmatprep.subr.mxu0 0.0
        %1835 = vmatpush1.msra.mxu0 0.0
        %1836 = vmatprep.subr.mxu0 0.0
        %1837 = vmatpush1.msra.mxu0 0.0
        %1838 = vmatprep.subr.mxu0 0.0
        %1839 = vmatpush1.msra.mxu0 0.0
        %1840 = vmatprep.subr.mxu0 0.0
        %1841 = vmatpush1.msra.mxu0 0.0
        %1842 = vmatprep.subr.mxu0 0.0
        %1843 = vmatpush1.msra.mxu0 0.0
        %1844 = vmatprep.subr.mxu0 0.0
        %1845 = vmatpush1.msra.mxu0 0.0
        %1846 = vmatprep.subr.mxu0 0.0
        %1847 = vmatpush1.msra.mxu0 0.0
        %1848 = vmatprep.subr.mxu0 0.0
        %1849 = vmatpush1.msra.mxu0 0.0
        %1850 = vmatprep.subr.mxu0 0.0
        %1851 = vmatpush1.msra.mxu0 0.0
        %1852 = vmatprep.subr.mxu0 0.0
        %1853 = vmatpush1.msra.mxu0 0.0
        %1854 = vmatprep.subr.mxu0 0.0
        %1855 = vmatpush1.msra.mxu0 0.0
        %1856 = vmatprep.subr.mxu0 0.0
        %1857 = vmatpush1.msra.mxu0 0.0
        %1858 = vmatprep.subr.mxu0 0.0
        %1859 = vmatpush1.msra.mxu0 0.0
        %1860 = vmatprep.subr.mxu0 0.0
        %1861 = vmatpush1.msra.mxu0 0.0
        %1862 = vmatprep.subr.mxu0 0.0
        %1863 = vmatpush1.msra.mxu0 0.0
        %1864 = vmatprep.subr.mxu0 0.0
        %1865 = vmatpush1.msra.mxu0 0.0
        %1866 = vmatprep.subr.mxu0 0.0
        %1867 = vmatpush1.msra.mxu0 0.0
        %1868 = vmatprep.subr.mxu0 0.0
        %1869 = vmatpush1.msra.mxu0 0.0
        %1870 = vmatprep.subr.mxu0 0.0
        %1871 = vmatpush1.msra.mxu0 0.0
        %1872 = vmatprep.subr.mxu0 0.0
        %1873 = vmatpush1.msra.mxu0 0.0
        %1874 = vmatprep.subr.mxu0 0.0
        %1875 = vmatpush1.msra.mxu0 0.0
        %1876 = vmatprep.subr.mxu0 0.0
        %1877 = vmatpush1.msra.mxu0 0.0
        %1878 = vmatprep.subr.mxu0 0.0
        %1879 = vmatpush1.msra.mxu0 0.0
        %1880 = vmatprep.subr.mxu0 0.0
        %1881 = vmatpush1.msra.mxu0 0.0
        %1882 = vmatprep.subr.mxu0 0.0
        %1883 = vmatpush1.msra.mxu0 0.0
        %1884 = vmatprep.subr.mxu0 0.0
        %1885 = vmatpush1.msra.mxu0 0.0
        %1886 = vmatprep.subr.mxu0 0.0
        %1887 = vmatpush1.msra.mxu0 0.0
        %1888 = vmatprep.subr.mxu0 0.0
        %1889 = vmatpush1.msra.mxu0 0.0
        %1890 = vmatprep.subr.mxu0 0.0
        %1891 = vmatpush1.msra.mxu0 0.0
        %1892 = vmatprep.mubr.f32.mxu0 0.0
        %1893 = vmatmul.mubr.f32.gmra.mrb[0].mxu0 %v1746
        %v1894 = vpop.f32.mrb[0].mxu0
        %v1895 = vadd.f32 %v1742, %v1894
        %v1896 = vpop.f32.mrb[0].mxu0
        %1897 = vdwg.mxu0
        %v1898 = vadd.f32 %v1824, %v317
        %v1899 = vadd.f32 %v1826, %v1732
        %v1900 = vadd.f32 %v1895, %v318
        %v1903 = vcombine.low %v1898, %v1899
        %1905 = vst [vmem:[%s307] sm:$0xff] %v1903
        %1906 = vst.msk [vmem:[%s307 + $0x8] sm:$0xf] %vm313, %v1900
        %s1907 = sand.u32 %s185, 1
        %s1908 = scalar_lea.sflag [#allocation7], %s1907
        %s1909 = sand.u32 %s185, 1
        %s1910 = smul.addr %s1909, 12
        %s1911 = scalar_lea.vmem [#allocation10], %s1910
        // Predicated region
        $region57: #{tpu_custom_call.1} parent=47 // pred_check
          %p1912 = pneg %p195
        $region58: #{tpu_custom_call.1} parent=47 // pred_check_branch
          %1914 = sbr.rel (%p1912) target = $region60
        $region59: #{tpu_custom_call.1} parent=47 // pred_region
          %s1916 = ssub.s32 192, 192
          %1917 = vsyncadd %s1908, %s1916
          %s1918 = smul.addr %s25, 3
          %s1919 = smul.addr %s1918, 64
          %s1920 = scalar_lea.hbm %s7, %s1919
          %s1922 = sshll.u32 %s1911, 4
          %s1923 = int_to_ptr.vmem [resolvable:$true] %s1922
          %1925 = dma.vmem_to_hbm [thread:$0]  %s1923, 192, %s1920, %s1908
        $region60: #{tpu_custom_call.1} parent=47 // pred_fallthru
          _
      $region48: #{tpu_custom_call.1} parent=5 // pred_fallthru
        _
      %p1926 = scmp.le.s32.totalorder 2, %s20
      // Predicated region
      $region61: #{tpu_custom_call.1} parent=5 // pred_check
        %p1927 = pneg %p1926
      $region62: #{tpu_custom_call.1} parent=5 // pred_check_branch
        %1929 = sbr.rel (%p1927) target = $region64
      $region63: #{tpu_custom_call.1} parent=5 // pred_region
        %s1930 = ssub.s32 %s20, 2
        // Predicated region
        $region65: #{tpu_custom_call.1} parent=63 // pred_check
          %p1931 = pneg %p201
        $region66: #{tpu_custom_call.1} parent=63 // pred_check_branch
          %1933 = sbr.rel (%p1931) target = $region68
        $region67: #{tpu_custom_call.1} parent=63 // pred_region
          %s1934 = sand.u32 %s186, 1
          %s1935 = scalar_lea.sflag [#allocation7], %s1934
          %s1936 = sand.u32 %s186, 1
          %s1937 = smul.addr %s1936, 12
          %s1938 = scalar_lea.vmem [#allocation10], %s1937
          %1939 = dma.done %s1935, 192
        $region68: #{tpu_custom_call.1} parent=63 // pred_fallthru
          _
      $region64: #{tpu_custom_call.1} parent=5 // pred_fallthru
        _
    $region6: #{tpu_custom_call.1} parent=1 // loop_footer
      %s24 = sadd.s32 1, %s20
    $region7: #{tpu_custom_call.1} parent=1 // loop_footer_branch
      %19 = sbr.rel target = $region3
    $region8: #{tpu_custom_call.1} parent=1 // loop_exit
      _
    %1940 = vsyncpa [#allocation6], 1
    %s1941 = scalar_lea.sflag [#allocation6], 1
    %1942 = vsyncpa %s1941, 1
    %1943 = vsyncpa [#allocation9], 1
    %1944 = vsyncpa [#allocation7], 1
    %s1945 = scalar_lea.sflag [#allocation7], 1
    %1946 = vsyncpa %s1945, 1

</llo_original>
